<compile_context>
chip_gen: v6e
topology: v6e:2x2x1
jax: 0.10.0
libtpu: 0.0.40
codegen_flags: <defaults>
</compile_context>

<pallas_src>
import functools

import jax
import jax.numpy as jnp
from jax import lax
from jax.experimental import pallas as pl
from jax.experimental.pallas import tpu as pltpu


# ---------------------------------------------------------------------------
# Fused kernel: qkv linear -> multi-head attention -> output projection
# ---------------------------------------------------------------------------
def _fused_attention_kernel(x_ref, qkv_w_ref, qkv_b_ref, proj_w_ref, proj_b_ref,
                            o_ref, *, num_heads, scale):
    # x block: (1, N, C) -> (N, C); weights are full-array blocks resident in
    # VMEM (index_map constant across the grid, so they are DMA'd once).
    x = x_ref[0].astype(jnp.float32)                       # (N, C)
    N, C = x.shape
    D = C // num_heads

    qkv_w = qkv_w_ref[...].astype(jnp.float32)             # (C, 3C)
    qkv_b = qkv_b_ref[...].astype(jnp.float32)             # (1, 3C)
    proj_w = proj_w_ref[...].astype(jnp.float32)           # (C, C)
    proj_b = proj_b_ref[...].astype(jnp.float32)           # (1, C)

    # qkv = self.qkv(x)      (QLinear; QAct/observers disabled)
    qkv = jnp.dot(x, qkv_w, preferred_element_type=jnp.float32) + qkv_b   # (N, 3C)

    # Per-head attention accumulated straight into the lane-dense (N, C) output
    # through that head's slice of the projection weight:
    #   out = sum_h softmax(q_h k_h^T * scale) v_h @ Wproj[h*D:(h+1)*D, :]
    acc = jnp.zeros((N, C), dtype=jnp.float32)
    for h in range(num_heads):                             # static, unrolled
        q = qkv[:, h * D:(h + 1) * D] * scale              # (N, D), scale folded into q
        k = qkv[:, C + h * D:C + (h + 1) * D]              # (N, D)
        v = qkv[:, 2 * C + h * D:2 * C + (h + 1) * D]      # (N, D)

        # scores = q @ k^T without materializing the transpose.
        s = lax.dot_general(q, k, (((1,), (1,)), ((), ())),
                            preferred_element_type=jnp.float32)           # (N, N)

        # numerically-stable softmax along the last axis (matches torch.softmax)
        s = s - jnp.max(s, axis=-1, keepdims=True)
        p = jnp.exp(s)
        p = p * pl.reciprocal(jnp.sum(p, axis=-1, keepdims=True), approx=True)

        o_h = jnp.dot(p, v, preferred_element_type=jnp.float32)           # (N, D)
        acc = acc + jnp.dot(o_h, proj_w[h * D:(h + 1) * D, :],
                            preferred_element_type=jnp.float32)           # (N, C)

    # x = self.proj(...) + bias   (proj_drop p=0 -> identity)
    o_ref[0] = (acc + proj_b).astype(o_ref.dtype)
    # TODO(synk): quantization fake-quant (QAct/QLinear observers), INT_SOFTMAX
    # path and the file-export forward hooks are disabled (quant=False), so this
    # matches the module's float forward exactly.


# ---------------------------------------------------------------------------
# Wrapper
# ---------------------------------------------------------------------------
def attention_forward(x, params, num_heads):
    """Full forward of the `Attention` module (quant disabled), single fused call."""
    B, N, C = x.shape
    D = C // num_heads
    scale = D ** (-0.5)

    qkv_w = params["qkv_w"]                        # (C, 3C)
    qkv_b = params["qkv_b"].reshape(1, 3 * C)
    proj_w = params["proj_w"]                      # (C, C)
    proj_b = params["proj_b"].reshape(1, C)

    kern = functools.partial(_fused_attention_kernel,
                             num_heads=num_heads, scale=scale)

    return pl.pallas_call(
        kern,
        out_shape=jax.ShapeDtypeStruct((B, N, C), x.dtype),
        grid_spec=pltpu.PrefetchScalarGridSpec(
            num_scalar_prefetch=0,
            grid=(B,),
            in_specs=[
                pl.BlockSpec((1, N, C), lambda b: (b, 0, 0)),       # x tile per batch
                pl.BlockSpec((C, 3 * C), lambda b: (0, 0)),         # qkv weight (resident)
                pl.BlockSpec((1, 3 * C), lambda b: (0, 0)),         # qkv bias
                pl.BlockSpec((C, C), lambda b: (0, 0)),             # proj weight (resident)
                pl.BlockSpec((1, C), lambda b: (0, 0)),             # proj bias
            ],
            out_specs=pl.BlockSpec((1, N, C), lambda b: (b, 0, 0)),  # lane-dense (N, C) tile
        ),
        compiler_params=pltpu.CompilerParams(
            dimension_semantics=("parallel",)),                      # megacore over B
    )(x, qkv_w, qkv_b, proj_w, proj_b)


# ---------------------------------------------------------------------------
# Reference (pure JAX) for a sanity check
# ---------------------------------------------------------------------------
def attention_reference(x, params, num_heads):
    B, N, C = x.shape
    D = C // num_heads
    scale = D ** (-0.5)
    qkv = x.reshape(B * N, C) @ params["qkv_w"] + params["qkv_b"]
    qkv = qkv.reshape(B, N, 3, num_heads, D).transpose(2, 0, 3, 1, 4)
    q, k, v = qkv[0], qkv[1], qkv[2]
    attn = jnp.einsum("bhnd,bhmd->bhnm", q, k) * scale
    attn = jax.nn.softmax(attn, axis=-1)
    out = jnp.einsum("bhnm,bhmd->bhnd", attn, v)
    out = out.transpose(0, 2, 1, 3).reshape(B * N, C)
    out = out @ params["proj_w"] + params["proj_b"]
    return out.reshape(B, N, C)


# ---------------------------------------------------------------------------
# Main
# ---------------------------------------------------------------------------
if __name__ == "__main__":
    B, N, C = 2, 8, 32
    num_heads = 8  # head_dim = 4

    key = jax.random.PRNGKey(0)
    k_x, k_qkv, k_proj_w, k_proj_b = jax.random.split(key, 4)

    x = jax.random.normal(k_x, (B, N, C), dtype=jnp.float32)

    # Deterministic parameter init (qkv_bias=False -> zero bias; proj has bias).
    params = {
        "qkv_w": jax.random.normal(k_qkv, (C, 3 * C), dtype=jnp.float32) * 0.05,
        "qkv_b": jnp.zeros((3 * C,), dtype=jnp.float32),
        "proj_w": jax.random.normal(k_proj_w, (C, C), dtype=jnp.float32) * 0.05,
        "proj_b": jax.random.normal(k_proj_b, (C,), dtype=jnp.float32) * 0.02,
    }

    out = attention_forward(x, params, num_heads)
    out = jax.block_until_ready(out)

    ref = attention_reference(x, params, num_heads)
    assert out.shape == (B, N, C)
    # slightly loosened tolerance: softmax denominator uses the EUP approximate
    # reciprocal (pl.reciprocal(..., approx=True))
    assert jnp.allclose(out, ref, atol=2e-3, rtol=2e-3), "mismatch vs reference"

    print("KERNEL_OK")
</pallas_src>

<mosaic_0001>
module attributes {stable_mosaic.version = 11 : i64} {
  func.func @_fused_attention_kernel(%arg0: i32, %arg1: memref<1x8x32xf32, #tpu.memory_space<vmem>>, %arg2: memref<32x96xf32, #tpu.memory_space<vmem>>, %arg3: memref<1x96xf32, #tpu.memory_space<vmem>>, %arg4: memref<32x32xf32, #tpu.memory_space<vmem>>, %arg5: memref<1x32xf32, #tpu.memory_space<vmem>>, %arg6: memref<1x8x32xf32, #tpu.memory_space<vmem>>) attributes {dimension_semantics = [#tpu.dimension_semantics<parallel>], iteration_bounds = array<i64: 2>, scalar_prefetch = 0 : i64, scratch_operands = 0 : i64, tpu.core_type = #tpu.core_type<tc>, window_params = [{transform_indices = @transform_0, window_bounds = array<i64: 1, 8, 32>}, {pipeline_mode = #tpu.pipeline_mode<synchronous>, transform_indices = @transform_1, window_bounds = array<i64: 32, 96>}, {pipeline_mode = #tpu.pipeline_mode<synchronous>, transform_indices = @transform_2, window_bounds = array<i64: 1, 96>}, {pipeline_mode = #tpu.pipeline_mode<synchronous>, transform_indices = @transform_3, window_bounds = array<i64: 32, 32>}, {pipeline_mode = #tpu.pipeline_mode<synchronous>, transform_indices = @transform_4, window_bounds = array<i64: 1, 32>}, {transform_indices = @transform_5, window_bounds = array<i64: 1, 8, 32>}]} {
    %c0 = arith.constant 0 : index
    %c0_0 = arith.constant 0 : index
    %c0_1 = arith.constant 0 : index
    %0 = vector.load %arg1[%c0, %c0_0, %c0_1] : memref<1x8x32xf32, #tpu.memory_space<vmem>>, vector<1x8x32xf32>
    %1 = vector.shape_cast %0 : vector<1x8x32xf32> to vector<8x32xf32>
    %c0_2 = arith.constant 0 : index
    %c0_3 = arith.constant 0 : index
    %2 = vector.load %arg2[%c0_2, %c0_3] : memref<32x96xf32, #tpu.memory_space<vmem>>, vector<32x96xf32>
    %c0_4 = arith.constant 0 : index
    %c0_5 = arith.constant 0 : index
    %3 = vector.load %arg3[%c0_4, %c0_5] : memref<1x96xf32, #tpu.memory_space<vmem>>, vector<1x96xf32>
    %c0_6 = arith.constant 0 : index
    %c0_7 = arith.constant 0 : index
    %4 = vector.load %arg4[%c0_6, %c0_7] : memref<32x32xf32, #tpu.memory_space<vmem>>, vector<32x32xf32>
    %c0_8 = arith.constant 0 : index
    %c0_9 = arith.constant 0 : index
    %5 = vector.load %arg5[%c0_8, %c0_9] : memref<1x32xf32, #tpu.memory_space<vmem>>, vector<1x32xf32>
    %cst = arith.constant dense<0.000000e+00> : vector<8x96xf32>
    %6 = tpu.matmul %1, %2, %cst {dimension_numbers = #tpu.dot_dimension_numbers<[1], [0], [0], [1], [0, 0, 1, 1], [], []>} : vector<8x32xf32>, vector<32x96xf32>, vector<8x96xf32> -> vector<8x96xf32>
    %7 = vector.broadcast %3 : vector<1x96xf32> to vector<8x96xf32>
    %8 = arith.addf %6, %7 : vector<8x96xf32>
    %cst_10 = arith.constant 0.000000e+00 : f32
    %9 = vector.broadcast %cst_10 : f32 to vector<8x32xf32>
    %10 = vector.extract_strided_slice %8 {offsets = [0, 0], sizes = [8, 4], strides = [1, 1]} : vector<8x96xf32> to vector<8x4xf32>
    %cst_11 = arith.constant 5.000000e-01 : f32
    %11 = vector.broadcast %cst_11 : f32 to vector<8x4xf32>
    %12 = arith.mulf %10, %11 : vector<8x4xf32>
    %13 = vector.extract_strided_slice %8 {offsets = [0, 32], sizes = [8, 4], strides = [1, 1]} : vector<8x96xf32> to vector<8x4xf32>
    %14 = vector.extract_strided_slice %8 {offsets = [0, 64], sizes = [8, 4], strides = [1, 1]} : vector<8x96xf32> to vector<8x4xf32>
    %cst_12 = arith.constant dense<0.000000e+00> : vector<8x8xf32>
    %15 = tpu.matmul %12, %13, %cst_12 {dimension_numbers = #tpu.dot_dimension_numbers<[1], [1], [0], [0], [0, 0, 1, 0], [], []>} : vector<8x4xf32>, vector<8x4xf32>, vector<8x8xf32> -> vector<8x8xf32>
    %cst_13 = arith.constant dense<0xFF800000> : vector<8xf32>
    %16 = vector.multi_reduction <maximumf>, %15, %cst_13 [1] : vector<8x8xf32> to vector<8xf32>
    %17 = vector.shape_cast %16 : vector<8xf32> to vector<8x1xf32>
    %18 = vector.broadcast %17 : vector<8x1xf32> to vector<8x8xf32>
    %19 = arith.subf %15, %18 : vector<8x8xf32>
    %20 = math.exp %19 : vector<8x8xf32>
    %cst_14 = arith.constant dense<0.000000e+00> : vector<8xf32>
    %21 = vector.multi_reduction <add>, %20, %cst_14 [1] : vector<8x8xf32> to vector<8xf32>
    %22 = vector.shape_cast %21 : vector<8xf32> to vector<8x1xf32>
    %23 = tpu.reciprocal %22 {approx = true} : vector<8x1xf32> -> vector<8x1xf32>
    %24 = vector.broadcast %23 : vector<8x1xf32> to vector<8x8xf32>
    %25 = arith.mulf %20, %24 : vector<8x8xf32>
    %cst_15 = arith.constant dense<0.000000e+00> : vector<8x4xf32>
    %26 = tpu.matmul %25, %14, %cst_15 {dimension_numbers = #tpu.dot_dimension_numbers<[1], [0], [0], [1], [0, 0, 1, 1], [], []>} : vector<8x8xf32>, vector<8x4xf32>, vector<8x4xf32> -> vector<8x4xf32>
    %27 = vector.extract_strided_slice %4 {offsets = [0, 0], sizes = [4, 32], strides = [1, 1]} : vector<32x32xf32> to vector<4x32xf32>
    %cst_16 = arith.constant dense<0.000000e+00> : vector<8x32xf32>
    %28 = tpu.matmul %26, %27, %cst_16 {dimension_numbers = #tpu.dot_dimension_numbers<[1], [0], [0], [1], [0, 0, 1, 1], [], []>} : vector<8x4xf32>, vector<4x32xf32>, vector<8x32xf32> -> vector<8x32xf32>
    %29 = arith.addf %9, %28 : vector<8x32xf32>
    %30 = vector.extract_strided_slice %8 {offsets = [0, 4], sizes = [8, 4], strides = [1, 1]} : vector<8x96xf32> to vector<8x4xf32>
    %cst_17 = arith.constant 5.000000e-01 : f32
    %31 = vector.broadcast %cst_17 : f32 to vector<8x4xf32>
    %32 = arith.mulf %30, %31 : vector<8x4xf32>
    %33 = vector.extract_strided_slice %8 {offsets = [0, 36], sizes = [8, 4], strides = [1, 1]} : vector<8x96xf32> to vector<8x4xf32>
    %34 = vector.extract_strided_slice %8 {offsets = [0, 68], sizes = [8, 4], strides = [1, 1]} : vector<8x96xf32> to vector<8x4xf32>
    %cst_18 = arith.constant dense<0.000000e+00> : vector<8x8xf32>
    %35 = tpu.matmul %32, %33, %cst_18 {dimension_numbers = #tpu.dot_dimension_numbers<[1], [1], [0], [0], [0, 0, 1, 0], [], []>} : vector<8x4xf32>, vector<8x4xf32>, vector<8x8xf32> -> vector<8x8xf32>
    %cst_19 = arith.constant dense<0xFF800000> : vector<8xf32>
    %36 = vector.multi_reduction <maximumf>, %35, %cst_19 [1] : vector<8x8xf32> to vector<8xf32>
    %37 = vector.shape_cast %36 : vector<8xf32> to vector<8x1xf32>
    %38 = vector.broadcast %37 : vector<8x1xf32> to vector<8x8xf32>
    %39 = arith.subf %35, %38 : vector<8x8xf32>
    %40 = math.exp %39 : vector<8x8xf32>
    %cst_20 = arith.constant dense<0.000000e+00> : vector<8xf32>
    %41 = vector.multi_reduction <add>, %40, %cst_20 [1] : vector<8x8xf32> to vector<8xf32>
    %42 = vector.shape_cast %41 : vector<8xf32> to vector<8x1xf32>
    %43 = tpu.reciprocal %42 {approx = true} : vector<8x1xf32> -> vector<8x1xf32>
    %44 = vector.broadcast %43 : vector<8x1xf32> to vector<8x8xf32>
    %45 = arith.mulf %40, %44 : vector<8x8xf32>
    %cst_21 = arith.constant dense<0.000000e+00> : vector<8x4xf32>
    %46 = tpu.matmul %45, %34, %cst_21 {dimension_numbers = #tpu.dot_dimension_numbers<[1], [0], [0], [1], [0, 0, 1, 1], [], []>} : vector<8x8xf32>, vector<8x4xf32>, vector<8x4xf32> -> vector<8x4xf32>
    %47 = vector.extract_strided_slice %4 {offsets = [4, 0], sizes = [4, 32], strides = [1, 1]} : vector<32x32xf32> to vector<4x32xf32>
    %cst_22 = arith.constant dense<0.000000e+00> : vector<8x32xf32>
    %48 = tpu.matmul %46, %47, %cst_22 {dimension_numbers = #tpu.dot_dimension_numbers<[1], [0], [0], [1], [0, 0, 1, 1], [], []>} : vector<8x4xf32>, vector<4x32xf32>, vector<8x32xf32> -> vector<8x32xf32>
    %49 = arith.addf %29, %48 : vector<8x32xf32>
    %50 = vector.extract_strided_slice %8 {offsets = [0, 8], sizes = [8, 4], strides = [1, 1]} : vector<8x96xf32> to vector<8x4xf32>
    %cst_23 = arith.constant 5.000000e-01 : f32
    %51 = vector.broadcast %cst_23 : f32 to vector<8x4xf32>
    %52 = arith.mulf %50, %51 : vector<8x4xf32>
    %53 = vector.extract_strided_slice %8 {offsets = [0, 40], sizes = [8, 4], strides = [1, 1]} : vector<8x96xf32> to vector<8x4xf32>
    %54 = vector.extract_strided_slice %8 {offsets = [0, 72], sizes = [8, 4], strides = [1, 1]} : vector<8x96xf32> to vector<8x4xf32>
    %cst_24 = arith.constant dense<0.000000e+00> : vector<8x8xf32>
    %55 = tpu.matmul %52, %53, %cst_24 {dimension_numbers = #tpu.dot_dimension_numbers<[1], [1], [0], [0], [0, 0, 1, 0], [], []>} : vector<8x4xf32>, vector<8x4xf32>, vector<8x8xf32> -> vector<8x8xf32>
    %cst_25 = arith.constant dense<0xFF800000> : vector<8xf32>
    %56 = vector.multi_reduction <maximumf>, %55, %cst_25 [1] : vector<8x8xf32> to vector<8xf32>
    %57 = vector.shape_cast %56 : vector<8xf32> to vector<8x1xf32>
    %58 = vector.broadcast %57 : vector<8x1xf32> to vector<8x8xf32>
    %59 = arith.subf %55, %58 : vector<8x8xf32>
    %60 = math.exp %59 : vector<8x8xf32>
    %cst_26 = arith.constant dense<0.000000e+00> : vector<8xf32>
    %61 = vector.multi_reduction <add>, %60, %cst_26 [1] : vector<8x8xf32> to vector<8xf32>
    %62 = vector.shape_cast %61 : vector<8xf32> to vector<8x1xf32>
    %63 = tpu.reciprocal %62 {approx = true} : vector<8x1xf32> -> vector<8x1xf32>
    %64 = vector.broadcast %63 : vector<8x1xf32> to vector<8x8xf32>
    %65 = arith.mulf %60, %64 : vector<8x8xf32>
    %cst_27 = arith.constant dense<0.000000e+00> : vector<8x4xf32>
    %66 = tpu.matmul %65, %54, %cst_27 {dimension_numbers = #tpu.dot_dimension_numbers<[1], [0], [0], [1], [0, 0, 1, 1], [], []>} : vector<8x8xf32>, vector<8x4xf32>, vector<8x4xf32> -> vector<8x4xf32>
    %67 = vector.extract_strided_slice %4 {offsets = [8, 0], sizes = [4, 32], strides = [1, 1]} : vector<32x32xf32> to vector<4x32xf32>
    %cst_28 = arith.constant dense<0.000000e+00> : vector<8x32xf32>
    %68 = tpu.matmul %66, %67, %cst_28 {dimension_numbers = #tpu.dot_dimension_numbers<[1], [0], [0], [1], [0, 0, 1, 1], [], []>} : vector<8x4xf32>, vector<4x32xf32>, vector<8x32xf32> -> vector<8x32xf32>
    %69 = arith.addf %49, %68 : vector<8x32xf32>
    %70 = vector.extract_strided_slice %8 {offsets = [0, 12], sizes = [8, 4], strides = [1, 1]} : vector<8x96xf32> to vector<8x4xf32>
    %cst_29 = arith.constant 5.000000e-01 : f32
    %71 = vector.broadcast %cst_29 : f32 to vector<8x4xf32>
    %72 = arith.mulf %70, %71 : vector<8x4xf32>
    %73 = vector.extract_strided_slice %8 {offsets = [0, 44], sizes = [8, 4], strides = [1, 1]} : vector<8x96xf32> to vector<8x4xf32>
    %74 = vector.extract_strided_slice %8 {offsets = [0, 76], sizes = [8, 4], strides = [1, 1]} : vector<8x96xf32> to vector<8x4xf32>
    %cst_30 = arith.constant dense<0.000000e+00> : vector<8x8xf32>
    %75 = tpu.matmul %72, %73, %cst_30 {dimension_numbers = #tpu.dot_dimension_numbers<[1], [1], [0], [0], [0, 0, 1, 0], [], []>} : vector<8x4xf32>, vector<8x4xf32>, vector<8x8xf32> -> vector<8x8xf32>
    %cst_31 = arith.constant dense<0xFF800000> : vector<8xf32>
    %76 = vector.multi_reduction <maximumf>, %75, %cst_31 [1] : vector<8x8xf32> to vector<8xf32>
    %77 = vector.shape_cast %76 : vector<8xf32> to vector<8x1xf32>
    %78 = vector.broadcast %77 : vector<8x1xf32> to vector<8x8xf32>
    %79 = arith.subf %75, %78 : vector<8x8xf32>
    %80 = math.exp %79 : vector<8x8xf32>
    %cst_32 = arith.constant dense<0.000000e+00> : vector<8xf32>
    %81 = vector.multi_reduction <add>, %80, %cst_32 [1] : vector<8x8xf32> to vector<8xf32>
    %82 = vector.shape_cast %81 : vector<8xf32> to vector<8x1xf32>
    %83 = tpu.reciprocal %82 {approx = true} : vector<8x1xf32> -> vector<8x1xf32>
    %84 = vector.broadcast %83 : vector<8x1xf32> to vector<8x8xf32>
    %85 = arith.mulf %80, %84 : vector<8x8xf32>
    %cst_33 = arith.constant dense<0.000000e+00> : vector<8x4xf32>
    %86 = tpu.matmul %85, %74, %cst_33 {dimension_numbers = #tpu.dot_dimension_numbers<[1], [0], [0], [1], [0, 0, 1, 1], [], []>} : vector<8x8xf32>, vector<8x4xf32>, vector<8x4xf32> -> vector<8x4xf32>
    %87 = vector.extract_strided_slice %4 {offsets = [12, 0], sizes = [4, 32], strides = [1, 1]} : vector<32x32xf32> to vector<4x32xf32>
    %cst_34 = arith.constant dense<0.000000e+00> : vector<8x32xf32>
    %88 = tpu.matmul %86, %87, %cst_34 {dimension_numbers = #tpu.dot_dimension_numbers<[1], [0], [0], [1], [0, 0, 1, 1], [], []>} : vector<8x4xf32>, vector<4x32xf32>, vector<8x32xf32> -> vector<8x32xf32>
    %89 = arith.addf %69, %88 : vector<8x32xf32>
    %90 = vector.extract_strided_slice %8 {offsets = [0, 16], sizes = [8, 4], strides = [1, 1]} : vector<8x96xf32> to vector<8x4xf32>
    %cst_35 = arith.constant 5.000000e-01 : f32
    %91 = vector.broadcast %cst_35 : f32 to vector<8x4xf32>
    %92 = arith.mulf %90, %91 : vector<8x4xf32>
    %93 = vector.extract_strided_slice %8 {offsets = [0, 48], sizes = [8, 4], strides = [1, 1]} : vector<8x96xf32> to vector<8x4xf32>
    %94 = vector.extract_strided_slice %8 {offsets = [0, 80], sizes = [8, 4], strides = [1, 1]} : vector<8x96xf32> to vector<8x4xf32>
    %cst_36 = arith.constant dense<0.000000e+00> : vector<8x8xf32>
    %95 = tpu.matmul %92, %93, %cst_36 {dimension_numbers = #tpu.dot_dimension_numbers<[1], [1], [0], [0], [0, 0, 1, 0], [], []>} : vector<8x4xf32>, vector<8x4xf32>, vector<8x8xf32> -> vector<8x8xf32>
    %cst_37 = arith.constant dense<0xFF800000> : vector<8xf32>
    %96 = vector.multi_reduction <maximumf>, %95, %cst_37 [1] : vector<8x8xf32> to vector<8xf32>
    %97 = vector.shape_cast %96 : vector<8xf32> to vector<8x1xf32>
    %98 = vector.broadcast %97 : vector<8x1xf32> to vector<8x8xf32>
    %99 = arith.subf %95, %98 : vector<8x8xf32>
    %100 = math.exp %99 : vector<8x8xf32>
    %cst_38 = arith.constant dense<0.000000e+00> : vector<8xf32>
    %101 = vector.multi_reduction <add>, %100, %cst_38 [1] : vector<8x8xf32> to vector<8xf32>
    %102 = vector.shape_cast %101 : vector<8xf32> to vector<8x1xf32>
    %103 = tpu.reciprocal %102 {approx = true} : vector<8x1xf32> -> vector<8x1xf32>
    %104 = vector.broadcast %103 : vector<8x1xf32> to vector<8x8xf32>
    %105 = arith.mulf %100, %104 : vector<8x8xf32>
    %cst_39 = arith.constant dense<0.000000e+00> : vector<8x4xf32>
    %106 = tpu.matmul %105, %94, %cst_39 {dimension_numbers = #tpu.dot_dimension_numbers<[1], [0], [0], [1], [0, 0, 1, 1], [], []>} : vector<8x8xf32>, vector<8x4xf32>, vector<8x4xf32> -> vector<8x4xf32>
    %107 = vector.extract_strided_slice %4 {offsets = [16, 0], sizes = [4, 32], strides = [1, 1]} : vector<32x32xf32> to vector<4x32xf32>
    %cst_40 = arith.constant dense<0.000000e+00> : vector<8x32xf32>
    %108 = tpu.matmul %106, %107, %cst_40 {dimension_numbers = #tpu.dot_dimension_numbers<[1], [0], [0], [1], [0, 0, 1, 1], [], []>} : vector<8x4xf32>, vector<4x32xf32>, vector<8x32xf32> -> vector<8x32xf32>
    %109 = arith.addf %89, %108 : vector<8x32xf32>
    %110 = vector.extract_strided_slice %8 {offsets = [0, 20], sizes = [8, 4], strides = [1, 1]} : vector<8x96xf32> to vector<8x4xf32>
    %cst_41 = arith.constant 5.000000e-01 : f32
    %111 = vector.broadcast %cst_41 : f32 to vector<8x4xf32>
    %112 = arith.mulf %110, %111 : vector<8x4xf32>
    %113 = vector.extract_strided_slice %8 {offsets = [0, 52], sizes = [8, 4], strides = [1, 1]} : vector<8x96xf32> to vector<8x4xf32>
    %114 = vector.extract_strided_slice %8 {offsets = [0, 84], sizes = [8, 4], strides = [1, 1]} : vector<8x96xf32> to vector<8x4xf32>
    %cst_42 = arith.constant dense<0.000000e+00> : vector<8x8xf32>
    %115 = tpu.matmul %112, %113, %cst_42 {dimension_numbers = #tpu.dot_dimension_numbers<[1], [1], [0], [0], [0, 0, 1, 0], [], []>} : vector<8x4xf32>, vector<8x4xf32>, vector<8x8xf32> -> vector<8x8xf32>
    %cst_43 = arith.constant dense<0xFF800000> : vector<8xf32>
    %116 = vector.multi_reduction <maximumf>, %115, %cst_43 [1] : vector<8x8xf32> to vector<8xf32>
    %117 = vector.shape_cast %116 : vector<8xf32> to vector<8x1xf32>
    %118 = vector.broadcast %117 : vector<8x1xf32> to vector<8x8xf32>
    %119 = arith.subf %115, %118 : vector<8x8xf32>
    %120 = math.exp %119 : vector<8x8xf32>
    %cst_44 = arith.constant dense<0.000000e+00> : vector<8xf32>
    %121 = vector.multi_reduction <add>, %120, %cst_44 [1] : vector<8x8xf32> to vector<8xf32>
    %122 = vector.shape_cast %121 : vector<8xf32> to vector<8x1xf32>
    %123 = tpu.reciprocal %122 {approx = true} : vector<8x1xf32> -> vector<8x1xf32>
    %124 = vector.broadcast %123 : vector<8x1xf32> to vector<8x8xf32>
    %125 = arith.mulf %120, %124 : vector<8x8xf32>
    %cst_45 = arith.constant dense<0.000000e+00> : vector<8x4xf32>
    %126 = tpu.matmul %125, %114, %cst_45 {dimension_numbers = #tpu.dot_dimension_numbers<[1], [0], [0], [1], [0, 0, 1, 1], [], []>} : vector<8x8xf32>, vector<8x4xf32>, vector<8x4xf32> -> vector<8x4xf32>
    %127 = vector.extract_strided_slice %4 {offsets = [20, 0], sizes = [4, 32], strides = [1, 1]} : vector<32x32xf32> to vector<4x32xf32>
    %cst_46 = arith.constant dense<0.000000e+00> : vector<8x32xf32>
    %128 = tpu.matmul %126, %127, %cst_46 {dimension_numbers = #tpu.dot_dimension_numbers<[1], [0], [0], [1], [0, 0, 1, 1], [], []>} : vector<8x4xf32>, vector<4x32xf32>, vector<8x32xf32> -> vector<8x32xf32>
    %129 = arith.addf %109, %128 : vector<8x32xf32>
    %130 = vector.extract_strided_slice %8 {offsets = [0, 24], sizes = [8, 4], strides = [1, 1]} : vector<8x96xf32> to vector<8x4xf32>
    %cst_47 = arith.constant 5.000000e-01 : f32
    %131 = vector.broadcast %cst_47 : f32 to vector<8x4xf32>
    %132 = arith.mulf %130, %131 : vector<8x4xf32>
    %133 = vector.extract_strided_slice %8 {offsets = [0, 56], sizes = [8, 4], strides = [1, 1]} : vector<8x96xf32> to vector<8x4xf32>
    %134 = vector.extract_strided_slice %8 {offsets = [0, 88], sizes = [8, 4], strides = [1, 1]} : vector<8x96xf32> to vector<8x4xf32>
    %cst_48 = arith.constant dense<0.000000e+00> : vector<8x8xf32>
    %135 = tpu.matmul %132, %133, %cst_48 {dimension_numbers = #tpu.dot_dimension_numbers<[1], [1], [0], [0], [0, 0, 1, 0], [], []>} : vector<8x4xf32>, vector<8x4xf32>, vector<8x8xf32> -> vector<8x8xf32>
    %cst_49 = arith.constant dense<0xFF800000> : vector<8xf32>
    %136 = vector.multi_reduction <maximumf>, %135, %cst_49 [1] : vector<8x8xf32> to vector<8xf32>
    %137 = vector.shape_cast %136 : vector<8xf32> to vector<8x1xf32>
    %138 = vector.broadcast %137 : vector<8x1xf32> to vector<8x8xf32>
    %139 = arith.subf %135, %138 : vector<8x8xf32>
    %140 = math.exp %139 : vector<8x8xf32>
    %cst_50 = arith.constant dense<0.000000e+00> : vector<8xf32>
    %141 = vector.multi_reduction <add>, %140, %cst_50 [1] : vector<8x8xf32> to vector<8xf32>
    %142 = vector.shape_cast %141 : vector<8xf32> to vector<8x1xf32>
    %143 = tpu.reciprocal %142 {approx = true} : vector<8x1xf32> -> vector<8x1xf32>
    %144 = vector.broadcast %143 : vector<8x1xf32> to vector<8x8xf32>
    %145 = arith.mulf %140, %144 : vector<8x8xf32>
    %cst_51 = arith.constant dense<0.000000e+00> : vector<8x4xf32>
    %146 = tpu.matmul %145, %134, %cst_51 {dimension_numbers = #tpu.dot_dimension_numbers<[1], [0], [0], [1], [0, 0, 1, 1], [], []>} : vector<8x8xf32>, vector<8x4xf32>, vector<8x4xf32> -> vector<8x4xf32>
    %147 = vector.extract_strided_slice %4 {offsets = [24, 0], sizes = [4, 32], strides = [1, 1]} : vector<32x32xf32> to vector<4x32xf32>
    %cst_52 = arith.constant dense<0.000000e+00> : vector<8x32xf32>
    %148 = tpu.matmul %146, %147, %cst_52 {dimension_numbers = #tpu.dot_dimension_numbers<[1], [0], [0], [1], [0, 0, 1, 1], [], []>} : vector<8x4xf32>, vector<4x32xf32>, vector<8x32xf32> -> vector<8x32xf32>
    %149 = arith.addf %129, %148 : vector<8x32xf32>
    %150 = vector.extract_strided_slice %8 {offsets = [0, 28], sizes = [8, 4], strides = [1, 1]} : vector<8x96xf32> to vector<8x4xf32>
    %cst_53 = arith.constant 5.000000e-01 : f32
    %151 = vector.broadcast %cst_53 : f32 to vector<8x4xf32>
    %152 = arith.mulf %150, %151 : vector<8x4xf32>
    %153 = vector.extract_strided_slice %8 {offsets = [0, 60], sizes = [8, 4], strides = [1, 1]} : vector<8x96xf32> to vector<8x4xf32>
    %154 = vector.extract_strided_slice %8 {offsets = [0, 92], sizes = [8, 4], strides = [1, 1]} : vector<8x96xf32> to vector<8x4xf32>
    %cst_54 = arith.constant dense<0.000000e+00> : vector<8x8xf32>
    %155 = tpu.matmul %152, %153, %cst_54 {dimension_numbers = #tpu.dot_dimension_numbers<[1], [1], [0], [0], [0, 0, 1, 0], [], []>} : vector<8x4xf32>, vector<8x4xf32>, vector<8x8xf32> -> vector<8x8xf32>
    %cst_55 = arith.constant dense<0xFF800000> : vector<8xf32>
    %156 = vector.multi_reduction <maximumf>, %155, %cst_55 [1] : vector<8x8xf32> to vector<8xf32>
    %157 = vector.shape_cast %156 : vector<8xf32> to vector<8x1xf32>
    %158 = vector.broadcast %157 : vector<8x1xf32> to vector<8x8xf32>
    %159 = arith.subf %155, %158 : vector<8x8xf32>
    %160 = math.exp %159 : vector<8x8xf32>
    %cst_56 = arith.constant dense<0.000000e+00> : vector<8xf32>
    %161 = vector.multi_reduction <add>, %160, %cst_56 [1] : vector<8x8xf32> to vector<8xf32>
    %162 = vector.shape_cast %161 : vector<8xf32> to vector<8x1xf32>
    %163 = tpu.reciprocal %162 {approx = true} : vector<8x1xf32> -> vector<8x1xf32>
    %164 = vector.broadcast %163 : vector<8x1xf32> to vector<8x8xf32>
    %165 = arith.mulf %160, %164 : vector<8x8xf32>
    %cst_57 = arith.constant dense<0.000000e+00> : vector<8x4xf32>
    %166 = tpu.matmul %165, %154, %cst_57 {dimension_numbers = #tpu.dot_dimension_numbers<[1], [0], [0], [1], [0, 0, 1, 1], [], []>} : vector<8x8xf32>, vector<8x4xf32>, vector<8x4xf32> -> vector<8x4xf32>
    %167 = vector.extract_strided_slice %4 {offsets = [28, 0], sizes = [4, 32], strides = [1, 1]} : vector<32x32xf32> to vector<4x32xf32>
    %cst_58 = arith.constant dense<0.000000e+00> : vector<8x32xf32>
    %168 = tpu.matmul %166, %167, %cst_58 {dimension_numbers = #tpu.dot_dimension_numbers<[1], [0], [0], [1], [0, 0, 1, 1], [], []>} : vector<8x4xf32>, vector<4x32xf32>, vector<8x32xf32> -> vector<8x32xf32>
    %169 = arith.addf %149, %168 : vector<8x32xf32>
    %170 = vector.broadcast %5 : vector<1x32xf32> to vector<8x32xf32>
    %171 = arith.addf %169, %170 : vector<8x32xf32>
    %c0_59 = arith.constant 0 : index
    %c0_60 = arith.constant 0 : index
    %c0_61 = arith.constant 0 : index
    %172 = vector.load %arg6[%c0_59, %c0_60, %c0_61] : memref<1x8x32xf32, #tpu.memory_space<vmem>>, vector<1x8x32xf32>
    %173 = vector.shape_cast %172 : vector<1x8x32xf32> to vector<8x32xf32>
    %174 = vector.shape_cast %171 : vector<8x32xf32> to vector<1x8x32xf32>
    tpu.vector_store %arg6[%c0_59, %c0_60, %c0_61], %174 {strides = array<i32>} : memref<1x8x32xf32, #tpu.memory_space<vmem>>, vector<1x8x32xf32>,
    return
  }
  func.func @transform_0(%arg0: i32) -> (i32, i32, i32) {
    %c0_i32 = arith.constant 0 : i32
    %c0_i32_0 = arith.constant 0 : i32
    %c0_i32_1 = arith.constant 0 : i32
    return %arg0, %c0_i32, %c0_i32_0 : i32, i32, i32
  }
  func.func @transform_1(%arg0: i32) -> (i32, i32) {
    %c0_i32 = arith.constant 0 : i32
    %c0_i32_0 = arith.constant 0 : i32
    %c0_i32_1 = arith.constant 0 : i32
    return %c0_i32, %c0_i32_0 : i32, i32
  }
  func.func @transform_2(%arg0: i32) -> (i32, i32) {
    %c0_i32 = arith.constant 0 : i32
    %c0_i32_0 = arith.constant 0 : i32
    %c0_i32_1 = arith.constant 0 : i32
    return %c0_i32, %c0_i32_0 : i32, i32
  }
  func.func @transform_3(%arg0: i32) -> (i32, i32) {
    %c0_i32 = arith.constant 0 : i32
    %c0_i32_0 = arith.constant 0 : i32
    %c0_i32_1 = arith.constant 0 : i32
    return %c0_i32, %c0_i32_0 : i32, i32
  }
  func.func @transform_4(%arg0: i32) -> (i32, i32) {
    %c0_i32 = arith.constant 0 : i32
    %c0_i32_0 = arith.constant 0 : i32
    %c0_i32_1 = arith.constant 0 : i32
    return %c0_i32, %c0_i32_0 : i32, i32
  }
  func.func @transform_5(%arg0: i32) -> (i32, i32, i32) {
    %c0_i32 = arith.constant 0 : i32
    %c0_i32_0 = arith.constant 0 : i32
    %c0_i32_1 = arith.constant 0 : i32
    return %arg0, %c0_i32, %c0_i32_0 : i32, i32, i32
  }
}

</mosaic_0001>

<llo_original>
// kernel: tpu_custom_call.1
$region0: #{tpu_custom_call.1}
  #allocation0 [shape = 'u32[]', space=smem, size = 0x4, offset = 0x4, fixed_abs, tag = 'smem constant byte address 0x4 - core index']
  #allocation1 [shape = 'u32[144,128]{1,0:T(1,128)}', space=vmem, size = 0x12000, scoped, tag = 'internal scratch']
  %s0 = inlined_call_operand.hbm [shape: f32[2,8,32], index: 0, kind: input, shape index: {}]
  %s1 = inlined_call_operand.hbm [shape: f32[32,96], index: 1, kind: input, shape index: {}]
  %s2 = inlined_call_operand.vmem [shape: f32[1,96], index: 2, kind: input, shape index: {}]
  %s3 = inlined_call_operand.hbm [shape: f32[32,32], index: 3, kind: input, shape index: {}]
  %s4 = inlined_call_operand.vmem [shape: f32[1,32], index: 4, kind: input, shape index: {}]
  %s5 = inlined_call_operand.hbm [shape: f32[2,8,32], index: 5, kind: output, shape index: {}]
  %s6 = sld [smem:[#allocation0]]
  $region65: #{tpu_custom_call.1} parent=0
    _
  %s8 = ssub.s32 1, %s6
  %s9 = scalar_select 0, %s8, %s6
  $region1: #{tpu_custom_call.1} parent=0
    #allocation2 [shape = 'u8[8192]{0}', space=vmem, size = 0x2000, scoped, tag = 'input window, operand 0']
    #allocation3 [shape = 's32[2]{0}', space=sflag, size = 0x8, scoped, tag = 'scoped memory for tpu_custom_call.1']
    #allocation4 [shape = 's32[2]{0}', space=sflag, size = 0x8, scoped, tag = 'scoped memory for tpu_custom_call.1']
    #allocation5 [shape = 'u8[16384]{0}', space=vmem, size = 0x4000, scoped, tag = 'input window, operand 1, single buffered']
    #allocation6 [shape = 's32[1]{0}', space=sflag, size = 0x4, scoped, tag = 'scoped memory for tpu_custom_call.1']
    #allocation7 [shape = 'u8[16384]{0}', space=vmem, size = 0x4000, scoped, tag = 'input window, operand 3, single buffered']
    #allocation8 [shape = 'u8[8192]{0}', space=vmem, size = 0x2000, scoped, tag = 'output window, operand 0']
    %10 = vsyncpa [#allocation3], 0
    %s11 = scalar_lea.sflag [#allocation3], 1
    %12 = vsyncpa %s11, 0
    %13 = vsyncpa [#allocation6], 0
    %14 = vsyncpa [#allocation4], 0
    %s15 = scalar_lea.sflag [#allocation4], 1
    %16 = vsyncpa %s15, 0
    loop: start=0, step=1, limit=4
    $region2: #{tpu_custom_call.1} parent=1 // loop_pre_header
      _
    $region3: #{tpu_custom_call.1} parent=1 // loop_header
      %s18 = sphi 0, %s22
      %p19 = scmp.ge.s32.totalorder %s18, 4
      %s28 = sphi 0, %s30
      %s31 = sphi 0, %s28
      %s32 = sphi 0, %s31
      %s48 = sphi 0, %s32
      %s52 = sphi 0, %s52
      %s54 = sphi 0, %s52
      %s55 = sphi 0, %s54
      %s69 = sphi 0, %s55
      %s73 = sphi 0, %s73
      %s75 = sphi 0, %s73
      %s76 = sphi 0, %s75
      %s90 = sphi 0, %s76
      %s94 = sphi 0, %s94
      %s96 = sphi 0, %s94
      %s97 = sphi 0, %s96
      %s111 = sphi 0, %s97
      %s115 = sphi 0, %s115
      %s117 = sphi 0, %s115
      %s118 = sphi 0, %s117
      %s132 = sphi 0, %s118
      %s138 = sphi 0, %s140
      %s141 = sphi 0, %s138
      %s142 = sphi 0, %s141
      %s158 = sphi 0, %s142
    $region4: #{tpu_custom_call.1} parent=1 // loop_header_branch
      %21 = sbr.rel (%p19) target = $region8
    $region5: #{tpu_custom_call.1} parent=1 // loop_body
      %s23 = ssub.s32 %s18, 1
      %s24 = ssub.s32 %s18, 2
      %s25 = sadd.s32 %s18, 1
      %s26 = ssub.s32 %s18, %s25
      %p27 = scmp.eq.s32.totalorder %s26, 0
      %s29 = sadd.s32 %s28, 1
      %s30 = scalar_select %p27, %s28, %s29
      %p33 = pneg %p27
      %p34 = scmp.eq.s32.totalorder %s18, 1
      %p35 = por %p33, %p34
      %p36 = scmp.ne.s32.totalorder %s28, %s31
      %p37 = scmp.eq.s32.totalorder %s18, 0
      %p38 = por %p36, %p37
      %p39 = scmp.ne.s32.totalorder %s28, %s31
      %p40 = scmp.eq.s32.totalorder %s23, 1
      %p41 = por %p39, %p40
      %p42 = scmp.ne.s32.totalorder %s31, %s32
      %p43 = scmp.eq.s32.totalorder %s23, 0
      %p44 = por %p42, %p43
      %p45 = scmp.ne.s32.totalorder %s31, %s32
      %p46 = scmp.eq.s32.totalorder %s24, 1
      %p47 = por %p45, %p46
      %p49 = scmp.ne.s32.totalorder %s32, %s48
      %p50 = scmp.eq.s32.totalorder %s24, 0
      %p51 = por %p49, %p50
      %s53 = sadd.s32 %s52, 1
      %p56 = scmp.eq.s32.totalorder %s18, 1
      %p57 = scmp.ne.s32.totalorder %s52, %s54
      %p58 = scmp.eq.s32.totalorder %s18, 0
      %p59 = por %p57, %p58
      %p60 = scmp.ne.s32.totalorder %s52, %s54
      %p61 = scmp.eq.s32.totalorder %s23, 1
      %p62 = por %p60, %p61
      %p63 = scmp.ne.s32.totalorder %s54, %s55
      %p64 = scmp.eq.s32.totalorder %s23, 0
      %p65 = por %p63, %p64
      %p66 = scmp.ne.s32.totalorder %s54, %s55
      %p67 = scmp.eq.s32.totalorder %s24, 1
      %p68 = por %p66, %p67
      %p70 = scmp.ne.s32.totalorder %s55, %s69
      %p71 = scmp.eq.s32.totalorder %s24, 0
      %p72 = por %p70, %p71
      %s74 = sadd.s32 %s73, 1
      %p77 = scmp.eq.s32.totalorder %s18, 1
      %p78 = scmp.ne.s32.totalorder %s73, %s75
      %p79 = scmp.eq.s32.totalorder %s18, 0
      %p80 = por %p78, %p79
      %p81 = scmp.ne.s32.totalorder %s73, %s75
      %p82 = scmp.eq.s32.totalorder %s23, 1
      %p83 = por %p81, %p82
      %p84 = scmp.ne.s32.totalorder %s75, %s76
      %p85 = scmp.eq.s32.totalorder %s23, 0
      %p86 = por %p84, %p85
      %p87 = scmp.ne.s32.totalorder %s75, %s76
      %p88 = scmp.eq.s32.totalorder %s24, 1
      %p89 = por %p87, %p88
      %p91 = scmp.ne.s32.totalorder %s76, %s90
      %p92 = scmp.eq.s32.totalorder %s24, 0
      %p93 = por %p91, %p92
      %s95 = sadd.s32 %s94, 1
      %p98 = scmp.eq.s32.totalorder %s18, 1
      %p99 = scmp.ne.s32.totalorder %s94, %s96
      %p100 = scmp.eq.s32.totalorder %s18, 0
      %p101 = por %p99, %p100
      %p102 = scmp.ne.s32.totalorder %s94, %s96
      %p103 = scmp.eq.s32.totalorder %s23, 1
      %p104 = por %p102, %p103
      %p105 = scmp.ne.s32.totalorder %s96, %s97
      %p106 = scmp.eq.s32.totalorder %s23, 0
      %p107 = por %p105, %p106
      %p108 = scmp.ne.s32.totalorder %s96, %s97
      %p109 = scmp.eq.s32.totalorder %s24, 1
      %p110 = por %p108, %p109
      %p112 = scmp.ne.s32.totalorder %s97, %s111
      %p113 = scmp.eq.s32.totalorder %s24, 0
      %p114 = por %p112, %p113
      %s116 = sadd.s32 %s115, 1
      %p119 = scmp.eq.s32.totalorder %s18, 1
      %p120 = scmp.ne.s32.totalorder %s115, %s117
      %p121 = scmp.eq.s32.totalorder %s18, 0
      %p122 = por %p120, %p121
      %p123 = scmp.ne.s32.totalorder %s115, %s117
      %p124 = scmp.eq.s32.totalorder %s23, 1
      %p125 = por %p123, %p124
      %p126 = scmp.ne.s32.totalorder %s117, %s118
      %p127 = scmp.eq.s32.totalorder %s23, 0
      %p128 = por %p126, %p127
      %p129 = scmp.ne.s32.totalorder %s117, %s118
      %p130 = scmp.eq.s32.totalorder %s24, 1
      %p131 = por %p129, %p130
      %p133 = scmp.ne.s32.totalorder %s118, %s132
      %p134 = scmp.eq.s32.totalorder %s24, 0
      %p135 = por %p133, %p134
      %s136 = ssub.s32 %s18, %s25
      %p137 = scmp.eq.s32.totalorder %s136, 0
      %s139 = sadd.s32 %s138, 1
      %s140 = scalar_select %p137, %s138, %s139
      %p143 = pneg %p137
      %p144 = scmp.eq.s32.totalorder %s18, 1
      %p145 = por %p143, %p144
      %p146 = scmp.ne.s32.totalorder %s138, %s141
      %p147 = scmp.eq.s32.totalorder %s18, 0
      %p148 = por %p146, %p147
      %p149 = scmp.ne.s32.totalorder %s138, %s141
      %p150 = scmp.eq.s32.totalorder %s23, 1
      %p151 = por %p149, %p150
      %p152 = scmp.ne.s32.totalorder %s141, %s142
      %p153 = scmp.eq.s32.totalorder %s23, 0
      %p154 = por %p152, %p153
      %p155 = scmp.ne.s32.totalorder %s141, %s142
      %p156 = scmp.eq.s32.totalorder %s24, 1
      %p157 = por %p155, %p156
      %p159 = scmp.ne.s32.totalorder %s142, %s158
      %p160 = scmp.eq.s32.totalorder %s24, 0
      %p161 = por %p159, %p160
      %p162 = scmp.le.s32.totalorder 1, %s18
      %p163 = scmp.lt.s32.totalorder %s18, 3
      %p164 = pnand %p162, %p163
      %p165 = pneg %p164
      // Predicated region
      $region9: #{tpu_custom_call.1} parent=5 // pred_check
        _
      $region10: #{tpu_custom_call.1} parent=5 // pred_check_branch
        %167 = sbr.rel (%p164) target = $region12
      $region11: #{tpu_custom_call.1} parent=5 // pred_region
        %s168 = ssub.s32 %s18, 1
        // Predicated region
        $region13: #{tpu_custom_call.1} parent=11 // pred_check
          %p169 = pneg %p65
        $region14: #{tpu_custom_call.1} parent=11 // pred_check_branch
          %171 = sbr.rel (%p169) target = $region16
        $region15: #{tpu_custom_call.1} parent=11 // pred_region
          %s173 = ssub.s32 512, 512
          %174 = vsyncadd [#allocation6], %s173
          %s175 = sshll.u32 [#allocation5], 4
          %s176 = int_to_ptr.vmem [resolvable:$true] %s175
          %181 = dma.hbm_to_vmem [thread:$0]  %s1, 512, %s176, [#allocation6], 128, 128, 8
        $region16: #{tpu_custom_call.1} parent=11 // pred_fallthru
          _
        // Predicated region
        $region17: #{tpu_custom_call.1} parent=11 // pred_check
          %p182 = pneg %p86
        $region18: #{tpu_custom_call.1} parent=11 // pred_check_branch
          %184 = sbr.rel (%p182) target = $region20
        $region19: #{tpu_custom_call.1} parent=11 // pred_region
          _
        $region20: #{tpu_custom_call.1} parent=11 // pred_fallthru
          _
        // Predicated region
        $region21: #{tpu_custom_call.1} parent=11 // pred_check
          %p185 = pneg %p107
        $region22: #{tpu_custom_call.1} parent=11 // pred_check_branch
          %187 = sbr.rel (%p185) target = $region24
        $region23: #{tpu_custom_call.1} parent=11 // pred_region
          %s189 = ssub.s32 512, 512
          %190 = vsyncadd [#allocation6], %s189
          %s191 = sshll.u32 [#allocation7], 4
          %s192 = int_to_ptr.vmem [resolvable:$true] %s191
          %197 = dma.hbm_to_vmem [thread:$0]  %s3, 512, %s192, [#allocation6], 128, 128, 8
        $region24: #{tpu_custom_call.1} parent=11 // pred_fallthru
          _
        // Predicated region
        $region25: #{tpu_custom_call.1} parent=11 // pred_check
          %p198 = pneg %p128
        $region26: #{tpu_custom_call.1} parent=11 // pred_check_branch
          %200 = sbr.rel (%p198) target = $region28
        $region27: #{tpu_custom_call.1} parent=11 // pred_region
          _
        $region28: #{tpu_custom_call.1} parent=11 // pred_fallthru
          _
      $region12: #{tpu_custom_call.1} parent=5 // pred_fallthru
        _
      %p201 = scmp.lt.s32.totalorder %s18, 2
      // Predicated region
      $region29: #{tpu_custom_call.1} parent=5 // pred_check
        %p202 = pneg %p201
      $region30: #{tpu_custom_call.1} parent=5 // pred_check_branch
        %204 = sbr.rel (%p202) target = $region32
      $region31: #{tpu_custom_call.1} parent=5 // pred_region
        // Predicated region
        $region33: #{tpu_custom_call.1} parent=31 // pred_check
          %p205 = pneg %p38
        $region34: #{tpu_custom_call.1} parent=31 // pred_check_branch
          %207 = sbr.rel (%p205) target = $region36
        $region35: #{tpu_custom_call.1} parent=31 // pred_region
          %s208 = sand.u32 %s28, 1
          %s209 = scalar_lea.sflag [#allocation3], %s208
          %s210 = sand.u32 %s28, 1
          %s211 = smul.addr %s210, 8
          %s212 = scalar_lea.vmem [#allocation2], %s211
          %s214 = ssub.s32 128, 128
          %215 = vsyncadd %s209, %s214
          %s216 = smul.addr %s18, 128
          %s217 = scalar_lea.hbm %s0, %s216
          %s219 = sshll.u32 %s212, 4
          %s220 = int_to_ptr.vmem [resolvable:$true] %s219
          %222 = dma.hbm_to_vmem [thread:$0]  %s217, 128, %s220, %s209
        $region36: #{tpu_custom_call.1} parent=31 // pred_fallthru
          _
      $region32: #{tpu_custom_call.1} parent=5 // pred_fallthru
        _
      %p223 = scmp.le.s32.totalorder 1, %s18
      %p224 = scmp.lt.s32.totalorder %s18, 3
      %p225 = pnand %p223, %p224
      %p226 = pneg %p225
      // Predicated region
      $region37: #{tpu_custom_call.1} parent=5 // pred_check
        _
      $region38: #{tpu_custom_call.1} parent=5 // pred_check_branch
        %228 = sbr.rel (%p225) target = $region40
      $region39: #{tpu_custom_call.1} parent=5 // pred_region
        %s229 = ssub.s32 %s18, 1
        %s230 = sand.u32 %s31, 1
        %s231 = scalar_lea.sflag [#allocation3], %s230
        %s232 = sand.u32 %s31, 1
        %s233 = smul.addr %s232, 8
        %s234 = scalar_lea.vmem [#allocation2], %s233
        // Predicated region
        $region41: #{tpu_custom_call.1} parent=39 // pred_check
          %p235 = pneg %p44
        $region42: #{tpu_custom_call.1} parent=39 // pred_check_branch
          %237 = sbr.rel (%p235) target = $region44
        $region43: #{tpu_custom_call.1} parent=39 // pred_region
          %238 = dma.done %s231, 128
        $region44: #{tpu_custom_call.1} parent=39 // pred_fallthru
          _
        // Predicated region
        $region45: #{tpu_custom_call.1} parent=39 // pred_check
          %p239 = pneg %p65
        $region46: #{tpu_custom_call.1} parent=39 // pred_check_branch
          %241 = sbr.rel (%p239) target = $region48
        $region47: #{tpu_custom_call.1} parent=39 // pred_region
          %242 = dma.done [#allocation6], 512
        $region48: #{tpu_custom_call.1} parent=39 // pred_fallthru
          _
        // Predicated region
        $region49: #{tpu_custom_call.1} parent=39 // pred_check
          %p243 = pneg %p107
        $region50: #{tpu_custom_call.1} parent=39 // pred_check_branch
          %245 = sbr.rel (%p243) target = $region52
        $region51: #{tpu_custom_call.1} parent=39 // pred_region
          %246 = dma.done [#allocation6], 512
        $region52: #{tpu_custom_call.1} parent=39 // pred_fallthru
          _
        %s247 = sand.u32 %s31, 1
        %s248 = scalar_lea.sflag [#allocation3], %s247
        %s249 = sand.u32 %s31, 1
        %s250 = smul.addr %s249, 8
        %s251 = scalar_lea.vmem [#allocation2], %s250
        %p252 = pneg %p44
        %p253 = pneg %p41
        %p254 = pneg %p65
        %p255 = pneg %p62
        %p256 = pneg %p86
        %p257 = pneg %p83
        %p258 = pneg %p107
        %p259 = pneg %p104
        %p260 = pneg %p128
        %p261 = pneg %p125
        %p262 = pneg %p154
        %p263 = pneg %p151
        %s264 = sand.u32 %s141, 1
        %s265 = scalar_lea.sflag [#allocation4], %s264
        %s266 = sand.u32 %s141, 1
        %s267 = smul.addr %s266, 8
        %s268 = scalar_lea.vmem [#allocation8], %s267
        %v269 = vld [vmem:[%s234] sm:$0xff]
        %v270 = vld [vmem:[#allocation5] sm:$0xff]
        %v271 = vld [vmem:[#allocation5 + $0x8] sm:$0xff]
        %v272 = vld [vmem:[#allocation5 + $0x10] sm:$0xff]
        %v273 = vld [vmem:[#allocation5 + $0x18] sm:$0xff]
        %v274 = vld [vmem:[%s2] sm:$0x1]
        %v275 = vld [vmem:[#allocation7] sm:$0xff]
        %v276 = vld [vmem:[#allocation7 + $0x8] sm:$0xff]
        %v277 = vld [vmem:[#allocation7 + $0x10] sm:$0xff]
        %v278 = vld [vmem:[#allocation7 + $0x18] sm:$0xff]
        %v279 = vld [vmem:[%s4] sm:$0x1]
        %v281 = vlaneseq
        %v282 = vshrl.u32 %v281, 7
        %v283 = vsub.s32 0, %v282
        %v284 = vrot.slane %v274, %v283
        %vm286 = vcmask 261120
        %v288 = vsel %vm286, %v269, 0
        %290 = vmatprep.subr.mxu0 0.0
        %291 = vmatpush1.msra.mxu0 0.0
        %292 = vmatprep.subr.mxu0 0.0
        %293 = vmatpush1.msra.mxu0 0.0
        %294 = vmatprep.subr.mxu0 0.0
        %295 = vmatpush1.msra.mxu0 0.0
        %296 = vmatprep.subr.mxu0 0.0
        %297 = vmatpush1.msra.mxu0 0.0
        %298 = vmatprep.subr.mxu0 0.0
        %299 = vmatpush1.msra.mxu0 0.0
        %300 = vmatprep.subr.mxu0 0.0
        %301 = vmatpush1.msra.mxu0 0.0
        %302 = vmatprep.subr.mxu0 0.0
        %303 = vmatpush1.msra.mxu0 0.0
        %304 = vmatprep.subr.mxu0 0.0
        %305 = vmatpush1.msra.mxu0 0.0
        %306 = vmatprep.subr.mxu0 0.0
        %307 = vmatpush1.msra.mxu0 0.0
        %308 = vmatprep.subr.mxu0 0.0
        %309 = vmatpush1.msra.mxu0 0.0
        %310 = vmatprep.subr.mxu0 0.0
        %311 = vmatpush1.msra.mxu0 0.0
        %312 = vmatprep.subr.mxu0 0.0
        %313 = vmatpush1.msra.mxu0 0.0
        %314 = vmatprep.subr.mxu0 0.0
        %315 = vmatpush1.msra.mxu0 %v273
        %316 = vmatprep.subr.mxu0 0.0
        %317 = vmatpush1.msra.mxu0 %v272
        %318 = vmatprep.subr.mxu0 0.0
        %319 = vmatpush1.msra.mxu0 %v271
        %320 = vmatprep.subr.mxu0 0.0
        %321 = vmatpush1.msra.mxu0 %v270
        %322 = vmatprep.subr.mxu0 0.0
        %323 = vmatpush2.msra.mxu0 0.0
        %324 = vmatprep.subr.mxu0 0.0
        %325 = vmatpush2.msra.mxu0 0.0
        %326 = vmatprep.subr.mxu0 0.0
        %327 = vmatpush2.msra.mxu0 0.0
        %328 = vmatprep.subr.mxu0 0.0
        %329 = vmatpush2.msra.mxu0 0.0
        %330 = vmatprep.subr.mxu0 0.0
        %331 = vmatpush2.msra.mxu0 0.0
        %332 = vmatprep.subr.mxu0 0.0
        %333 = vmatpush2.msra.mxu0 0.0
        %334 = vmatprep.subr.mxu0 0.0
        %335 = vmatpush2.msra.mxu0 0.0
        %336 = vmatprep.subr.mxu0 0.0
        %337 = vmatpush2.msra.mxu0 0.0
        %338 = vmatprep.subr.mxu0 0.0
        %339 = vmatpush2.msra.mxu0 0.0
        %340 = vmatprep.subr.mxu0 0.0
        %341 = vmatpush2.msra.mxu0 0.0
        %342 = vmatprep.subr.mxu0 0.0
        %343 = vmatpush2.msra.mxu0 0.0
        %344 = vmatprep.subr.mxu0 0.0
        %345 = vmatpush2.msra.mxu0 0.0
        %346 = vmatprep.subr.mxu0 0.0
        %347 = vmatpush2.msra.mxu0 0.0
        %348 = vmatprep.subr.mxu0 0.0
        %349 = vmatpush2.msra.mxu0 0.0
        %350 = vmatprep.subr.mxu0 0.0
        %351 = vmatpush2.msra.mxu0 0.0
        %352 = vmatprep.subr.mxu0 0.0
        %353 = vmatpush2.msra.mxu0 0.0
        %354 = vmatprep.mubr.f32.mxu0 0.0
        %355 = vmatmul.mubr.f32.gmra.mxu0 %v288
        %v356 = vpop.f32.mrf.mxu0
        %v357 = vadd.f32 %v284, %v356
        %v358 = vpop.f32.mrf.mxu0
        %359 = vdwg.mxu0
        %v360 = vmul.f32 %v357, 0.5
        %362 = vrot.lane.b32.xlu0 %v357, 96
        %v363 = vpop.permute.xlu0 %362
        %vm364 = vcmask 31744
        %v366 = vsel %vm364, %v360, 0
        %v368 = vsel %vm364, %v363, 0
        %370 = vmatprep.subr.mxu0 0.0
        %371 = vmatpush1.xpose.msra.mxu0 0.0
        %372 = vmatprep.subr.mxu0 0.0
        %373 = vmatpush1.xpose.msra.mxu0 0.0
        %374 = vmatprep.subr.mxu0 0.0
        %375 = vmatpush1.xpose.msra.mxu0 0.0
        %376 = vmatprep.subr.mxu0 0.0
        %377 = vmatpush1.xpose.msra.mxu0 0.0
        %378 = vmatprep.subr.mxu0 0.0
        %379 = vmatpush1.xpose.msra.mxu0 0.0
        %380 = vmatprep.subr.mxu0 0.0
        %381 = vmatpush1.xpose.msra.mxu0 0.0
        %382 = vmatprep.subr.mxu0 0.0
        %383 = vmatpush1.xpose.msra.mxu0 0.0
        %384 = vmatprep.subr.mxu0 0.0
        %385 = vmatpush1.xpose.msra.mxu0 0.0
        %386 = vmatprep.subr.mxu0 0.0
        %387 = vmatpush1.xpose.msra.mxu0 0.0
        %388 = vmatprep.subr.mxu0 0.0
        %389 = vmatpush1.xpose.msra.mxu0 0.0
        %390 = vmatprep.subr.mxu0 0.0
        %391 = vmatpush1.xpose.msra.mxu0 0.0
        %392 = vmatprep.subr.mxu0 0.0
        %393 = vmatpush1.xpose.msra.mxu0 0.0
        %394 = vmatprep.subr.mxu0 0.0
        %395 = vmatpush1.xpose.msra.mxu0 0.0
        %396 = vmatprep.subr.mxu0 0.0
        %397 = vmatpush1.xpose.msra.mxu0 0.0
        %398 = vmatprep.subr.mxu0 0.0
        %399 = vmatpush1.xpose.msra.mxu0 0.0
        %400 = vmatprep.subr.mxu0 0.0
        %401 = vmatpush1.xpose.msra.mxu0 %v368
        %402 = vmatprep.subr.mxu0 0.0
        %403 = vmatpush2.xpose.msra.mxu0 0.0
        %404 = vmatprep.subr.mxu0 0.0
        %405 = vmatpush2.xpose.msra.mxu0 0.0
        %406 = vmatprep.subr.mxu0 0.0
        %407 = vmatpush2.xpose.msra.mxu0 0.0
        %408 = vmatprep.subr.mxu0 0.0
        %409 = vmatpush2.xpose.msra.mxu0 0.0
        %410 = vmatprep.subr.mxu0 0.0
        %411 = vmatpush2.xpose.msra.mxu0 0.0
        %412 = vmatprep.subr.mxu0 0.0
        %413 = vmatpush2.xpose.msra.mxu0 0.0
        %414 = vmatprep.subr.mxu0 0.0
        %415 = vmatpush2.xpose.msra.mxu0 0.0
        %416 = vmatprep.subr.mxu0 0.0
        %417 = vmatpush2.xpose.msra.mxu0 0.0
        %418 = vmatprep.subr.mxu0 0.0
        %419 = vmatpush2.xpose.msra.mxu0 0.0
        %420 = vmatprep.subr.mxu0 0.0
        %421 = vmatpush2.xpose.msra.mxu0 0.0
        %422 = vmatprep.subr.mxu0 0.0
        %423 = vmatpush2.xpose.msra.mxu0 0.0
        %424 = vmatprep.subr.mxu0 0.0
        %425 = vmatpush2.xpose.msra.mxu0 0.0
        %426 = vmatprep.subr.mxu0 0.0
        %427 = vmatpush2.xpose.msra.mxu0 0.0
        %428 = vmatprep.subr.mxu0 0.0
        %429 = vmatpush2.xpose.msra.mxu0 0.0
        %430 = vmatprep.subr.mxu0 0.0
        %431 = vmatpush2.xpose.msra.mxu0 0.0
        %432 = vmatprep.subr.mxu0 0.0
        %433 = vmatpush2.xpose.msra.mxu0 0.0
        %434 = vmatprep.mubr.f32.mxu0 0.0
        %435 = vmatmul.mubr.f32.gmra.mxu0 %v366
        %v436 = vpop.f32.mrf.mxu0
        %v437 = vadd.f32 0.0, %v436
        %v438 = vpop.f32.mrf.mxu0
        %439 = vdwg.mxu0
        %vm440 = vcmask 64512
        %v441 = vsel %vm440, %v437, -inf
        %442 = vmax.xlane.f32.xlu0 %v441
        %v443 = vpop.xlane.xlu0 %442
        %v444 = vsub.f32 %v437, %v443
        %v445 = vmul.f32 %v444, 1.442695
        %v446 = vpow.pop %v445
        %v447 = vsel %vm440, %v446, 0.0
        %448 = vadd.xlane.f32.xlu0 %v447
        %v449 = vpop.xlane.xlu0 %448
        %v450 = vrcp.pop %v449
        %v451 = vmul.f32 %v446, %v450
        %452 = vrot.lane.b32.xlu0 %v357, 64
        %v453 = vpop.permute.xlu0 %452
        %v456 = vsel %vm440, %v451, 0
        %458 = vmatprep.subr.mxu0 0.0
        %459 = vmatpush1.msra.mxu0 0.0
        %460 = vmatprep.subr.mxu0 0.0
        %461 = vmatpush1.msra.mxu0 0.0
        %462 = vmatprep.subr.mxu0 0.0
        %463 = vmatpush1.msra.mxu0 0.0
        %464 = vmatprep.subr.mxu0 0.0
        %465 = vmatpush1.msra.mxu0 0.0
        %466 = vmatprep.subr.mxu0 0.0
        %467 = vmatpush1.msra.mxu0 0.0
        %468 = vmatprep.subr.mxu0 0.0
        %469 = vmatpush1.msra.mxu0 0.0
        %470 = vmatprep.subr.mxu0 0.0
        %471 = vmatpush1.msra.mxu0 0.0
        %472 = vmatprep.subr.mxu0 0.0
        %473 = vmatpush1.msra.mxu0 0.0
        %474 = vmatprep.subr.mxu0 0.0
        %475 = vmatpush1.msra.mxu0 0.0
        %476 = vmatprep.subr.mxu0 0.0
        %477 = vmatpush1.msra.mxu0 0.0
        %478 = vmatprep.subr.mxu0 0.0
        %479 = vmatpush1.msra.mxu0 0.0
        %480 = vmatprep.subr.mxu0 0.0
        %481 = vmatpush1.msra.mxu0 0.0
        %482 = vmatprep.subr.mxu0 0.0
        %483 = vmatpush1.msra.mxu0 0.0
        %484 = vmatprep.subr.mxu0 0.0
        %485 = vmatpush1.msra.mxu0 0.0
        %486 = vmatprep.subr.mxu0 0.0
        %487 = vmatpush1.msra.mxu0 0.0
        %488 = vmatprep.subr.mxu0 0.0
        %489 = vmatpush1.msra.mxu0 %v453
        %490 = vmatprep.subr.mxu0 0.0
        %491 = vmatpush2.msra.mxu0 0.0
        %492 = vmatprep.subr.mxu0 0.0
        %493 = vmatpush2.msra.mxu0 0.0
        %494 = vmatprep.subr.mxu0 0.0
        %495 = vmatpush2.msra.mxu0 0.0
        %496 = vmatprep.subr.mxu0 0.0
        %497 = vmatpush2.msra.mxu0 0.0
        %498 = vmatprep.subr.mxu0 0.0
        %499 = vmatpush2.msra.mxu0 0.0
        %500 = vmatprep.subr.mxu0 0.0
        %501 = vmatpush2.msra.mxu0 0.0
        %502 = vmatprep.subr.mxu0 0.0
        %503 = vmatpush2.msra.mxu0 0.0
        %504 = vmatprep.subr.mxu0 0.0
        %505 = vmatpush2.msra.mxu0 0.0
        %506 = vmatprep.subr.mxu0 0.0
        %507 = vmatpush2.msra.mxu0 0.0
        %508 = vmatprep.subr.mxu0 0.0
        %509 = vmatpush2.msra.mxu0 0.0
        %510 = vmatprep.subr.mxu0 0.0
        %511 = vmatpush2.msra.mxu0 0.0
        %512 = vmatprep.subr.mxu0 0.0
        %513 = vmatpush2.msra.mxu0 0.0
        %514 = vmatprep.subr.mxu0 0.0
        %515 = vmatpush2.msra.mxu0 0.0
        %516 = vmatprep.subr.mxu0 0.0
        %517 = vmatpush2.msra.mxu0 0.0
        %518 = vmatprep.subr.mxu0 0.0
        %519 = vmatpush2.msra.mxu0 0.0
        %520 = vmatprep.subr.mxu0 0.0
        %521 = vmatpush2.msra.mxu0 0.0
        %522 = vmatprep.mubr.f32.mxu0 0.0
        %523 = vmatmul.mubr.f32.gmra.mxu0 %v456
        %v524 = vpop.f32.mrf.mxu0
        %v525 = vadd.f32 0.0, %v524
        %v526 = vpop.f32.mrf.mxu0
        %527 = vdwg.mxu0
        %528 = vrot.lane.b32.xlu0 %v360, 124
        %v529 = vpop.permute.xlu0 %528
        %530 = vrot.lane.b32.xlu0 %v357, 92
        %v531 = vpop.permute.xlu0 %530
        %v532 = vsel %vm364, %v529, 0
        %v534 = vsel %vm364, %v531, 0
        %536 = vmatprep.subr.mxu0 0.0
        %537 = vmatpush1.xpose.msra.mxu0 0.0
        %538 = vmatprep.subr.mxu0 0.0
        %539 = vmatpush1.xpose.msra.mxu0 0.0
        %540 = vmatprep.subr.mxu0 0.0
        %541 = vmatpush1.xpose.msra.mxu0 0.0
        %542 = vmatprep.subr.mxu0 0.0
        %543 = vmatpush1.xpose.msra.mxu0 0.0
        %544 = vmatprep.subr.mxu0 0.0
        %545 = vmatpush1.xpose.msra.mxu0 0.0
        %546 = vmatprep.subr.mxu0 0.0
        %547 = vmatpush1.xpose.msra.mxu0 0.0
        %548 = vmatprep.subr.mxu0 0.0
        %549 = vmatpush1.xpose.msra.mxu0 0.0
        %550 = vmatprep.subr.mxu0 0.0
        %551 = vmatpush1.xpose.msra.mxu0 0.0
        %552 = vmatprep.subr.mxu0 0.0
        %553 = vmatpush1.xpose.msra.mxu0 0.0
        %554 = vmatprep.subr.mxu0 0.0
        %555 = vmatpush1.xpose.msra.mxu0 0.0
        %556 = vmatprep.subr.mxu0 0.0
        %557 = vmatpush1.xpose.msra.mxu0 0.0
        %558 = vmatprep.subr.mxu0 0.0
        %559 = vmatpush1.xpose.msra.mxu0 0.0
        %560 = vmatprep.subr.mxu0 0.0
        %561 = vmatpush1.xpose.msra.mxu0 0.0
        %562 = vmatprep.subr.mxu0 0.0
        %563 = vmatpush1.xpose.msra.mxu0 0.0
        %564 = vmatprep.subr.mxu0 0.0
        %565 = vmatpush1.xpose.msra.mxu0 0.0
        %566 = vmatprep.subr.mxu0 0.0
        %567 = vmatpush1.xpose.msra.mxu0 %v534
        %568 = vmatprep.subr.mxu0 0.0
        %569 = vmatpush2.xpose.msra.mxu0 0.0
        %570 = vmatprep.subr.mxu0 0.0
        %571 = vmatpush2.xpose.msra.mxu0 0.0
        %572 = vmatprep.subr.mxu0 0.0
        %573 = vmatpush2.xpose.msra.mxu0 0.0
        %574 = vmatprep.subr.mxu0 0.0
        %575 = vmatpush2.xpose.msra.mxu0 0.0
        %576 = vmatprep.subr.mxu0 0.0
        %577 = vmatpush2.xpose.msra.mxu0 0.0
        %578 = vmatprep.subr.mxu0 0.0
        %579 = vmatpush2.xpose.msra.mxu0 0.0
        %580 = vmatprep.subr.mxu0 0.0
        %581 = vmatpush2.xpose.msra.mxu0 0.0
        %582 = vmatprep.subr.mxu0 0.0
        %583 = vmatpush2.xpose.msra.mxu0 0.0
        %584 = vmatprep.subr.mxu0 0.0
        %585 = vmatpush2.xpose.msra.mxu0 0.0
        %586 = vmatprep.subr.mxu0 0.0
        %587 = vmatpush2.xpose.msra.mxu0 0.0
        %588 = vmatprep.subr.mxu0 0.0
        %589 = vmatpush2.xpose.msra.mxu0 0.0
        %590 = vmatprep.subr.mxu0 0.0
        %591 = vmatpush2.xpose.msra.mxu0 0.0
        %592 = vmatprep.subr.mxu0 0.0
        %593 = vmatpush2.xpose.msra.mxu0 0.0
        %594 = vmatprep.subr.mxu0 0.0
        %595 = vmatpush2.xpose.msra.mxu0 0.0
        %596 = vmatprep.subr.mxu0 0.0
        %597 = vmatpush2.xpose.msra.mxu0 0.0
        %598 = vmatprep.subr.mxu0 0.0
        %599 = vmatpush2.xpose.msra.mxu0 0.0
        %600 = vmatprep.mubr.f32.mxu0 0.0
        %601 = vmatmul.mubr.f32.gmra.mxu0 %v532
        %v602 = vpop.f32.mrf.mxu0
        %v603 = vadd.f32 0.0, %v602
        %v604 = vpop.f32.mrf.mxu0
        %605 = vdwg.mxu0
        %v606 = vsel %vm440, %v603, -inf
        %607 = vmax.xlane.f32.xlu0 %v606
        %v608 = vpop.xlane.xlu0 %607
        %v609 = vsub.f32 %v603, %v608
        %v610 = vmul.f32 %v609, 1.442695
        %v611 = vpow.pop %v610
        %v612 = vsel %vm440, %v611, 0.0
        %613 = vadd.xlane.f32.xlu0 %v612
        %v614 = vpop.xlane.xlu0 %613
        %v615 = vrcp.pop %v614
        %v616 = vmul.f32 %v611, %v615
        %617 = vrot.lane.b32.xlu0 %v357, 60
        %v618 = vpop.permute.xlu0 %617
        %v621 = vsel %vm440, %v616, 0
        %623 = vmatprep.subr.mxu0 0.0
        %624 = vmatpush1.msra.mxu0 0.0
        %625 = vmatprep.subr.mxu0 0.0
        %626 = vmatpush1.msra.mxu0 0.0
        %627 = vmatprep.subr.mxu0 0.0
        %628 = vmatpush1.msra.mxu0 0.0
        %629 = vmatprep.subr.mxu0 0.0
        %630 = vmatpush1.msra.mxu0 0.0
        %631 = vmatprep.subr.mxu0 0.0
        %632 = vmatpush1.msra.mxu0 0.0
        %633 = vmatprep.subr.mxu0 0.0
        %634 = vmatpush1.msra.mxu0 0.0
        %635 = vmatprep.subr.mxu0 0.0
        %636 = vmatpush1.msra.mxu0 0.0
        %637 = vmatprep.subr.mxu0 0.0
        %638 = vmatpush1.msra.mxu0 0.0
        %639 = vmatprep.subr.mxu0 0.0
        %640 = vmatpush1.msra.mxu0 0.0
        %641 = vmatprep.subr.mxu0 0.0
        %642 = vmatpush1.msra.mxu0 0.0
        %643 = vmatprep.subr.mxu0 0.0
        %644 = vmatpush1.msra.mxu0 0.0
        %645 = vmatprep.subr.mxu0 0.0
        %646 = vmatpush1.msra.mxu0 0.0
        %647 = vmatprep.subr.mxu0 0.0
        %648 = vmatpush1.msra.mxu0 0.0
        %649 = vmatprep.subr.mxu0 0.0
        %650 = vmatpush1.msra.mxu0 0.0
        %651 = vmatprep.subr.mxu0 0.0
        %652 = vmatpush1.msra.mxu0 0.0
        %653 = vmatprep.subr.mxu0 0.0
        %654 = vmatpush1.msra.mxu0 %v618
        %655 = vmatprep.subr.mxu0 0.0
        %656 = vmatpush2.msra.mxu0 0.0
        %657 = vmatprep.subr.mxu0 0.0
        %658 = vmatpush2.msra.mxu0 0.0
        %659 = vmatprep.subr.mxu0 0.0
        %660 = vmatpush2.msra.mxu0 0.0
        %661 = vmatprep.subr.mxu0 0.0
        %662 = vmatpush2.msra.mxu0 0.0
        %663 = vmatprep.subr.mxu0 0.0
        %664 = vmatpush2.msra.mxu0 0.0
        %665 = vmatprep.subr.mxu0 0.0
        %666 = vmatpush2.msra.mxu0 0.0
        %667 = vmatprep.subr.mxu0 0.0
        %668 = vmatpush2.msra.mxu0 0.0
        %669 = vmatprep.subr.mxu0 0.0
        %670 = vmatpush2.msra.mxu0 0.0
        %671 = vmatprep.subr.mxu0 0.0
        %672 = vmatpush2.msra.mxu0 0.0
        %673 = vmatprep.subr.mxu0 0.0
        %674 = vmatpush2.msra.mxu0 0.0
        %675 = vmatprep.subr.mxu0 0.0
        %676 = vmatpush2.msra.mxu0 0.0
        %677 = vmatprep.subr.mxu0 0.0
        %678 = vmatpush2.msra.mxu0 0.0
        %679 = vmatprep.subr.mxu0 0.0
        %680 = vmatpush2.msra.mxu0 0.0
        %681 = vmatprep.subr.mxu0 0.0
        %682 = vmatpush2.msra.mxu0 0.0
        %683 = vmatprep.subr.mxu0 0.0
        %684 = vmatpush2.msra.mxu0 0.0
        %685 = vmatprep.subr.mxu0 0.0
        %686 = vmatpush2.msra.mxu0 0.0
        %687 = vmatprep.mubr.f32.mxu0 0.0
        %688 = vmatmul.mubr.f32.gmra.mxu0 %v621
        %v689 = vpop.f32.mrf.mxu0
        %v690 = vadd.f32 0.0, %v689
        %v691 = vpop.f32.mrf.mxu0
        %692 = vdwg.mxu0
        %v694 = vrot.slane %v275, 4
        %v696 = vsel %vm364, %v690, 0
        %vm698 = vcmask 1043456
        %v699 = vsel %vm698, %v694, 0
        %701 = vmatprep.subr.mxu0 0.0
        %702 = vmatpush1.msra.mxu0 0.0
        %703 = vmatprep.subr.mxu0 0.0
        %704 = vmatpush1.msra.mxu0 0.0
        %705 = vmatprep.subr.mxu0 0.0
        %706 = vmatpush1.msra.mxu0 0.0
        %707 = vmatprep.subr.mxu0 0.0
        %708 = vmatpush1.msra.mxu0 0.0
        %709 = vmatprep.subr.mxu0 0.0
        %710 = vmatpush1.msra.mxu0 0.0
        %711 = vmatprep.subr.mxu0 0.0
        %712 = vmatpush1.msra.mxu0 0.0
        %713 = vmatprep.subr.mxu0 0.0
        %714 = vmatpush1.msra.mxu0 0.0
        %715 = vmatprep.subr.mxu0 0.0
        %716 = vmatpush1.msra.mxu0 0.0
        %717 = vmatprep.subr.mxu0 0.0
        %718 = vmatpush1.msra.mxu0 0.0
        %719 = vmatprep.subr.mxu0 0.0
        %720 = vmatpush1.msra.mxu0 0.0
        %721 = vmatprep.subr.mxu0 0.0
        %722 = vmatpush1.msra.mxu0 0.0
        %723 = vmatprep.subr.mxu0 0.0
        %724 = vmatpush1.msra.mxu0 0.0
        %725 = vmatprep.subr.mxu0 0.0
        %726 = vmatpush1.msra.mxu0 0.0
        %727 = vmatprep.subr.mxu0 0.0
        %728 = vmatpush1.msra.mxu0 0.0
        %729 = vmatprep.subr.mxu0 0.0
        %730 = vmatpush1.msra.mxu0 0.0
        %731 = vmatprep.subr.mxu0 0.0
        %732 = vmatpush1.msra.mxu0 %v699
        %733 = vmatprep.subr.mxu0 0.0
        %734 = vmatpush2.msra.mxu0 0.0
        %735 = vmatprep.subr.mxu0 0.0
        %736 = vmatpush2.msra.mxu0 0.0
        %737 = vmatprep.subr.mxu0 0.0
        %738 = vmatpush2.msra.mxu0 0.0
        %739 = vmatprep.subr.mxu0 0.0
        %740 = vmatpush2.msra.mxu0 0.0
        %741 = vmatprep.subr.mxu0 0.0
        %742 = vmatpush2.msra.mxu0 0.0
        %743 = vmatprep.subr.mxu0 0.0
        %744 = vmatpush2.msra.mxu0 0.0
        %745 = vmatprep.subr.mxu0 0.0
        %746 = vmatpush2.msra.mxu0 0.0
        %747 = vmatprep.subr.mxu0 0.0
        %748 = vmatpush2.msra.mxu0 0.0
        %749 = vmatprep.subr.mxu0 0.0
        %750 = vmatpush2.msra.mxu0 0.0
        %751 = vmatprep.subr.mxu0 0.0
        %752 = vmatpush2.msra.mxu0 0.0
        %753 = vmatprep.subr.mxu0 0.0
        %754 = vmatpush2.msra.mxu0 0.0
        %755 = vmatprep.subr.mxu0 0.0
        %756 = vmatpush2.msra.mxu0 0.0
        %757 = vmatprep.subr.mxu0 0.0
        %758 = vmatpush2.msra.mxu0 0.0
        %759 = vmatprep.subr.mxu0 0.0
        %760 = vmatpush2.msra.mxu0 0.0
        %761 = vmatprep.subr.mxu0 0.0
        %762 = vmatpush2.msra.mxu0 0.0
        %763 = vmatprep.subr.mxu0 0.0
        %764 = vmatpush2.msra.mxu0 0.0
        %765 = vmatprep.mubr.f32.mxu0 0.0
        %766 = vmatmul.mubr.f32.gmra.mxu0 %v696
        %v767 = vpop.f32.mrf.mxu0
        %v768 = vadd.f32 0.0, %v767
        %v769 = vpop.f32.mrf.mxu0
        %770 = vdwg.mxu0
        %v772 = vsel %vm364, %v525, 0
        %v774 = vsel %vm698, %v275, 0
        %776 = vmatprep.subr.mxu0 0.0
        %777 = vmatpush1.msra.mxu0 0.0
        %778 = vmatprep.subr.mxu0 0.0
        %779 = vmatpush1.msra.mxu0 0.0
        %780 = vmatprep.subr.mxu0 0.0
        %781 = vmatpush1.msra.mxu0 0.0
        %782 = vmatprep.subr.mxu0 0.0
        %783 = vmatpush1.msra.mxu0 0.0
        %784 = vmatprep.subr.mxu0 0.0
        %785 = vmatpush1.msra.mxu0 0.0
        %786 = vmatprep.subr.mxu0 0.0
        %787 = vmatpush1.msra.mxu0 0.0
        %788 = vmatprep.subr.mxu0 0.0
        %789 = vmatpush1.msra.mxu0 0.0
        %790 = vmatprep.subr.mxu0 0.0
        %791 = vmatpush1.msra.mxu0 0.0
        %792 = vmatprep.subr.mxu0 0.0
        %793 = vmatpush1.msra.mxu0 0.0
        %794 = vmatprep.subr.mxu0 0.0
        %795 = vmatpush1.msra.mxu0 0.0
        %796 = vmatprep.subr.mxu0 0.0
        %797 = vmatpush1.msra.mxu0 0.0
        %798 = vmatprep.subr.mxu0 0.0
        %799 = vmatpush1.msra.mxu0 0.0
        %800 = vmatprep.subr.mxu0 0.0
        %801 = vmatpush1.msra.mxu0 0.0
        %802 = vmatprep.subr.mxu0 0.0
        %803 = vmatpush1.msra.mxu0 0.0
        %804 = vmatprep.subr.mxu0 0.0
        %805 = vmatpush1.msra.mxu0 0.0
        %806 = vmatprep.subr.mxu0 0.0
        %807 = vmatpush1.msra.mxu0 %v774
        %808 = vmatprep.subr.mxu0 0.0
        %809 = vmatpush2.msra.mxu0 0.0
        %810 = vmatprep.subr.mxu0 0.0
        %811 = vmatpush2.msra.mxu0 0.0
        %812 = vmatprep.subr.mxu0 0.0
        %813 = vmatpush2.msra.mxu0 0.0
        %814 = vmatprep.subr.mxu0 0.0
        %815 = vmatpush2.msra.mxu0 0.0
        %816 = vmatprep.subr.mxu0 0.0
        %817 = vmatpush2.msra.mxu0 0.0
        %818 = vmatprep.subr.mxu0 0.0
        %819 = vmatpush2.msra.mxu0 0.0
        %820 = vmatprep.subr.mxu0 0.0
        %821 = vmatpush2.msra.mxu0 0.0
        %822 = vmatprep.subr.mxu0 0.0
        %823 = vmatpush2.msra.mxu0 0.0
        %824 = vmatprep.subr.mxu0 0.0
        %825 = vmatpush2.msra.mxu0 0.0
        %826 = vmatprep.subr.mxu0 0.0
        %827 = vmatpush2.msra.mxu0 0.0
        %828 = vmatprep.subr.mxu0 0.0
        %829 = vmatpush2.msra.mxu0 0.0
        %830 = vmatprep.subr.mxu0 0.0
        %831 = vmatpush2.msra.mxu0 0.0
        %832 = vmatprep.subr.mxu0 0.0
        %833 = vmatpush2.msra.mxu0 0.0
        %834 = vmatprep.subr.mxu0 0.0
        %835 = vmatpush2.msra.mxu0 0.0
        %836 = vmatprep.subr.mxu0 0.0
        %837 = vmatpush2.msra.mxu0 0.0
        %838 = vmatprep.subr.mxu0 0.0
        %839 = vmatpush2.msra.mxu0 0.0
        %840 = vmatprep.mubr.f32.mxu0 0.0
        %841 = vmatmul.mubr.f32.gmra.mxu0 %v772
        %v842 = vpop.f32.mrf.mxu0
        %v843 = vadd.f32 %v768, %v842
        %v844 = vpop.f32.mrf.mxu0
        %845 = vdwg.mxu0
        %846 = vrot.lane.b32.xlu0 %v360, 120
        %v847 = vpop.permute.xlu0 %846
        %848 = vrot.lane.b32.xlu0 %v357, 88
        %v849 = vpop.permute.xlu0 %848
        %v850 = vsel %vm364, %v847, 0
        %v852 = vsel %vm364, %v849, 0
        %854 = vmatprep.subr.mxu0 0.0
        %855 = vmatpush1.xpose.msra.mxu0 0.0
        %856 = vmatprep.subr.mxu0 0.0
        %857 = vmatpush1.xpose.msra.mxu0 0.0
        %858 = vmatprep.subr.mxu0 0.0
        %859 = vmatpush1.xpose.msra.mxu0 0.0
        %860 = vmatprep.subr.mxu0 0.0
        %861 = vmatpush1.xpose.msra.mxu0 0.0
        %862 = vmatprep.subr.mxu0 0.0
        %863 = vmatpush1.xpose.msra.mxu0 0.0
        %864 = vmatprep.subr.mxu0 0.0
        %865 = vmatpush1.xpose.msra.mxu0 0.0
        %866 = vmatprep.subr.mxu0 0.0
        %867 = vmatpush1.xpose.msra.mxu0 0.0
        %868 = vmatprep.subr.mxu0 0.0
        %869 = vmatpush1.xpose.msra.mxu0 0.0
        %870 = vmatprep.subr.mxu0 0.0
        %871 = vmatpush1.xpose.msra.mxu0 0.0
        %872 = vmatprep.subr.mxu0 0.0
        %873 = vmatpush1.xpose.msra.mxu0 0.0
        %874 = vmatprep.subr.mxu0 0.0
        %875 = vmatpush1.xpose.msra.mxu0 0.0
        %876 = vmatprep.subr.mxu0 0.0
        %877 = vmatpush1.xpose.msra.mxu0 0.0
        %878 = vmatprep.subr.mxu0 0.0
        %879 = vmatpush1.xpose.msra.mxu0 0.0
        %880 = vmatprep.subr.mxu0 0.0
        %881 = vmatpush1.xpose.msra.mxu0 0.0
        %882 = vmatprep.subr.mxu0 0.0
        %883 = vmatpush1.xpose.msra.mxu0 0.0
        %884 = vmatprep.subr.mxu0 0.0
        %885 = vmatpush1.xpose.msra.mxu0 %v852
        %886 = vmatprep.subr.mxu0 0.0
        %887 = vmatpush2.xpose.msra.mxu0 0.0
        %888 = vmatprep.subr.mxu0 0.0
        %889 = vmatpush2.xpose.msra.mxu0 0.0
        %890 = vmatprep.subr.mxu0 0.0
        %891 = vmatpush2.xpose.msra.mxu0 0.0
        %892 = vmatprep.subr.mxu0 0.0
        %893 = vmatpush2.xpose.msra.mxu0 0.0
        %894 = vmatprep.subr.mxu0 0.0
        %895 = vmatpush2.xpose.msra.mxu0 0.0
        %896 = vmatprep.subr.mxu0 0.0
        %897 = vmatpush2.xpose.msra.mxu0 0.0
        %898 = vmatprep.subr.mxu0 0.0
        %899 = vmatpush2.xpose.msra.mxu0 0.0
        %900 = vmatprep.subr.mxu0 0.0
        %901 = vmatpush2.xpose.msra.mxu0 0.0
        %902 = vmatprep.subr.mxu0 0.0
        %903 = vmatpush2.xpose.msra.mxu0 0.0
        %904 = vmatprep.subr.mxu0 0.0
        %905 = vmatpush2.xpose.msra.mxu0 0.0
        %906 = vmatprep.subr.mxu0 0.0
        %907 = vmatpush2.xpose.msra.mxu0 0.0
        %908 = vmatprep.subr.mxu0 0.0
        %909 = vmatpush2.xpose.msra.mxu0 0.0
        %910 = vmatprep.subr.mxu0 0.0
        %911 = vmatpush2.xpose.msra.mxu0 0.0
        %912 = vmatprep.subr.mxu0 0.0
        %913 = vmatpush2.xpose.msra.mxu0 0.0
        %914 = vmatprep.subr.mxu0 0.0
        %915 = vmatpush2.xpose.msra.mxu0 0.0
        %916 = vmatprep.subr.mxu0 0.0
        %917 = vmatpush2.xpose.msra.mxu0 0.0
        %918 = vmatprep.mubr.f32.mxu0 0.0
        %919 = vmatmul.mubr.f32.gmra.mxu0 %v850
        %v920 = vpop.f32.mrf.mxu0
        %v921 = vadd.f32 0.0, %v920
        %v922 = vpop.f32.mrf.mxu0
        %923 = vdwg.mxu0
        %v924 = vsel %vm440, %v921, -inf
        %925 = vmax.xlane.f32.xlu0 %v924
        %v926 = vpop.xlane.xlu0 %925
        %v927 = vsub.f32 %v921, %v926
        %v928 = vmul.f32 %v927, 1.442695
        %v929 = vpow.pop %v928
        %v930 = vsel %vm440, %v929, 0.0
        %931 = vadd.xlane.f32.xlu0 %v930
        %v932 = vpop.xlane.xlu0 %931
        %v933 = vrcp.pop %v932
        %v934 = vmul.f32 %v929, %v933
        %935 = vrot.lane.b32.xlu0 %v357, 56
        %v936 = vpop.permute.xlu0 %935
        %v939 = vsel %vm440, %v934, 0
        %941 = vmatprep.subr.mxu0 0.0
        %942 = vmatpush1.msra.mxu0 0.0
        %943 = vmatprep.subr.mxu0 0.0
        %944 = vmatpush1.msra.mxu0 0.0
        %945 = vmatprep.subr.mxu0 0.0
        %946 = vmatpush1.msra.mxu0 0.0
        %947 = vmatprep.subr.mxu0 0.0
        %948 = vmatpush1.msra.mxu0 0.0
        %949 = vmatprep.subr.mxu0 0.0
        %950 = vmatpush1.msra.mxu0 0.0
        %951 = vmatprep.subr.mxu0 0.0
        %952 = vmatpush1.msra.mxu0 0.0
        %953 = vmatprep.subr.mxu0 0.0
        %954 = vmatpush1.msra.mxu0 0.0
        %955 = vmatprep.subr.mxu0 0.0
        %956 = vmatpush1.msra.mxu0 0.0
        %957 = vmatprep.subr.mxu0 0.0
        %958 = vmatpush1.msra.mxu0 0.0
        %959 = vmatprep.subr.mxu0 0.0
        %960 = vmatpush1.msra.mxu0 0.0
        %961 = vmatprep.subr.mxu0 0.0
        %962 = vmatpush1.msra.mxu0 0.0
        %963 = vmatprep.subr.mxu0 0.0
        %964 = vmatpush1.msra.mxu0 0.0
        %965 = vmatprep.subr.mxu0 0.0
        %966 = vmatpush1.msra.mxu0 0.0
        %967 = vmatprep.subr.mxu0 0.0
        %968 = vmatpush1.msra.mxu0 0.0
        %969 = vmatprep.subr.mxu0 0.0
        %970 = vmatpush1.msra.mxu0 0.0
        %971 = vmatprep.subr.mxu0 0.0
        %972 = vmatpush1.msra.mxu0 %v936
        %973 = vmatprep.subr.mxu0 0.0
        %974 = vmatpush2.msra.mxu0 0.0
        %975 = vmatprep.subr.mxu0 0.0
        %976 = vmatpush2.msra.mxu0 0.0
        %977 = vmatprep.subr.mxu0 0.0
        %978 = vmatpush2.msra.mxu0 0.0
        %979 = vmatprep.subr.mxu0 0.0
        %980 = vmatpush2.msra.mxu0 0.0
        %981 = vmatprep.subr.mxu0 0.0
        %982 = vmatpush2.msra.mxu0 0.0
        %983 = vmatprep.subr.mxu0 0.0
        %984 = vmatpush2.msra.mxu0 0.0
        %985 = vmatprep.subr.mxu0 0.0
        %986 = vmatpush2.msra.mxu0 0.0
        %987 = vmatprep.subr.mxu0 0.0
        %988 = vmatpush2.msra.mxu0 0.0
        %989 = vmatprep.subr.mxu0 0.0
        %990 = vmatpush2.msra.mxu0 0.0
        %991 = vmatprep.subr.mxu0 0.0
        %992 = vmatpush2.msra.mxu0 0.0
        %993 = vmatprep.subr.mxu0 0.0
        %994 = vmatpush2.msra.mxu0 0.0
        %995 = vmatprep.subr.mxu0 0.0
        %996 = vmatpush2.msra.mxu0 0.0
        %997 = vmatprep.subr.mxu0 0.0
        %998 = vmatpush2.msra.mxu0 0.0
        %999 = vmatprep.subr.mxu0 0.0
        %1000 = vmatpush2.msra.mxu0 0.0
        %1001 = vmatprep.subr.mxu0 0.0
        %1002 = vmatpush2.msra.mxu0 0.0
        %1003 = vmatprep.subr.mxu0 0.0
        %1004 = vmatpush2.msra.mxu0 0.0
        %1005 = vmatprep.mubr.f32.mxu0 0.0
        %1006 = vmatmul.mubr.f32.gmra.mxu0 %v939
        %v1007 = vpop.f32.mrf.mxu0
        %v1008 = vadd.f32 0.0, %v1007
        %v1009 = vpop.f32.mrf.mxu0
        %1010 = vdwg.mxu0
        %v1012 = vsel %vm364, %v1008, 0
        %v1015 = vsel %vm698, %v276, 0
        %1017 = vmatprep.subr.mxu0 0.0
        %1018 = vmatpush1.msra.mxu0 0.0
        %1019 = vmatprep.subr.mxu0 0.0
        %1020 = vmatpush1.msra.mxu0 0.0
        %1021 = vmatprep.subr.mxu0 0.0
        %1022 = vmatpush1.msra.mxu0 0.0
        %1023 = vmatprep.subr.mxu0 0.0
        %1024 = vmatpush1.msra.mxu0 0.0
        %1025 = vmatprep.subr.mxu0 0.0
        %1026 = vmatpush1.msra.mxu0 0.0
        %1027 = vmatprep.subr.mxu0 0.0
        %1028 = vmatpush1.msra.mxu0 0.0
        %1029 = vmatprep.subr.mxu0 0.0
        %1030 = vmatpush1.msra.mxu0 0.0
        %1031 = vmatprep.subr.mxu0 0.0
        %1032 = vmatpush1.msra.mxu0 0.0
        %1033 = vmatprep.subr.mxu0 0.0
        %1034 = vmatpush1.msra.mxu0 0.0
        %1035 = vmatprep.subr.mxu0 0.0
        %1036 = vmatpush1.msra.mxu0 0.0
        %1037 = vmatprep.subr.mxu0 0.0
        %1038 = vmatpush1.msra.mxu0 0.0
        %1039 = vmatprep.subr.mxu0 0.0
        %1040 = vmatpush1.msra.mxu0 0.0
        %1041 = vmatprep.subr.mxu0 0.0
        %1042 = vmatpush1.msra.mxu0 0.0
        %1043 = vmatprep.subr.mxu0 0.0
        %1044 = vmatpush1.msra.mxu0 0.0
        %1045 = vmatprep.subr.mxu0 0.0
        %1046 = vmatpush1.msra.mxu0 0.0
        %1047 = vmatprep.subr.mxu0 0.0
        %1048 = vmatpush1.msra.mxu0 %v1015
        %1049 = vmatprep.subr.mxu0 0.0
        %1050 = vmatpush2.msra.mxu0 0.0
        %1051 = vmatprep.subr.mxu0 0.0
        %1052 = vmatpush2.msra.mxu0 0.0
        %1053 = vmatprep.subr.mxu0 0.0
        %1054 = vmatpush2.msra.mxu0 0.0
        %1055 = vmatprep.subr.mxu0 0.0
        %1056 = vmatpush2.msra.mxu0 0.0
        %1057 = vmatprep.subr.mxu0 0.0
        %1058 = vmatpush2.msra.mxu0 0.0
        %1059 = vmatprep.subr.mxu0 0.0
        %1060 = vmatpush2.msra.mxu0 0.0
        %1061 = vmatprep.subr.mxu0 0.0
        %1062 = vmatpush2.msra.mxu0 0.0
        %1063 = vmatprep.subr.mxu0 0.0
        %1064 = vmatpush2.msra.mxu0 0.0
        %1065 = vmatprep.subr.mxu0 0.0
        %1066 = vmatpush2.msra.mxu0 0.0
        %1067 = vmatprep.subr.mxu0 0.0
        %1068 = vmatpush2.msra.mxu0 0.0
        %1069 = vmatprep.subr.mxu0 0.0
        %1070 = vmatpush2.msra.mxu0 0.0
        %1071 = vmatprep.subr.mxu0 0.0
        %1072 = vmatpush2.msra.mxu0 0.0
        %1073 = vmatprep.subr.mxu0 0.0
        %1074 = vmatpush2.msra.mxu0 0.0
        %1075 = vmatprep.subr.mxu0 0.0
        %1076 = vmatpush2.msra.mxu0 0.0
        %1077 = vmatprep.subr.mxu0 0.0
        %1078 = vmatpush2.msra.mxu0 0.0
        %1079 = vmatprep.subr.mxu0 0.0
        %1080 = vmatpush2.msra.mxu0 0.0
        %1081 = vmatprep.mubr.f32.mxu0 0.0
        %1082 = vmatmul.mubr.f32.gmra.mxu0 %v1012
        %v1083 = vpop.f32.mrf.mxu0
        %v1084 = vadd.f32 0.0, %v1083
        %v1085 = vpop.f32.mrf.mxu0
        %1086 = vdwg.mxu0
        %v1087 = vadd.f32 %v843, %v1084
        %1088 = vrot.lane.b32.xlu0 %v360, 116
        %v1089 = vpop.permute.xlu0 %1088
        %1090 = vrot.lane.b32.xlu0 %v357, 84
        %v1091 = vpop.permute.xlu0 %1090
        %v1092 = vsel %vm364, %v1089, 0
        %v1094 = vsel %vm364, %v1091, 0
        %1096 = vmatprep.subr.mxu0 0.0
        %1097 = vmatpush1.xpose.msra.mxu0 0.0
        %1098 = vmatprep.subr.mxu0 0.0
        %1099 = vmatpush1.xpose.msra.mxu0 0.0
        %1100 = vmatprep.subr.mxu0 0.0
        %1101 = vmatpush1.xpose.msra.mxu0 0.0
        %1102 = vmatprep.subr.mxu0 0.0
        %1103 = vmatpush1.xpose.msra.mxu0 0.0
        %1104 = vmatprep.subr.mxu0 0.0
        %1105 = vmatpush1.xpose.msra.mxu0 0.0
        %1106 = vmatprep.subr.mxu0 0.0
        %1107 = vmatpush1.xpose.msra.mxu0 0.0
        %1108 = vmatprep.subr.mxu0 0.0
        %1109 = vmatpush1.xpose.msra.mxu0 0.0
        %1110 = vmatprep.subr.mxu0 0.0
        %1111 = vmatpush1.xpose.msra.mxu0 0.0
        %1112 = vmatprep.subr.mxu0 0.0
        %1113 = vmatpush1.xpose.msra.mxu0 0.0
        %1114 = vmatprep.subr.mxu0 0.0
        %1115 = vmatpush1.xpose.msra.mxu0 0.0
        %1116 = vmatprep.subr.mxu0 0.0
        %1117 = vmatpush1.xpose.msra.mxu0 0.0
        %1118 = vmatprep.subr.mxu0 0.0
        %1119 = vmatpush1.xpose.msra.mxu0 0.0
        %1120 = vmatprep.subr.mxu0 0.0
        %1121 = vmatpush1.xpose.msra.mxu0 0.0
        %1122 = vmatprep.subr.mxu0 0.0
        %1123 = vmatpush1.xpose.msra.mxu0 0.0
        %1124 = vmatprep.subr.mxu0 0.0
        %1125 = vmatpush1.xpose.msra.mxu0 0.0
        %1126 = vmatprep.subr.mxu0 0.0
        %1127 = vmatpush1.xpose.msra.mxu0 %v1094
        %1128 = vmatprep.subr.mxu0 0.0
        %1129 = vmatpush2.xpose.msra.mxu0 0.0
        %1130 = vmatprep.subr.mxu0 0.0
        %1131 = vmatpush2.xpose.msra.mxu0 0.0
        %1132 = vmatprep.subr.mxu0 0.0
        %1133 = vmatpush2.xpose.msra.mxu0 0.0
        %1134 = vmatprep.subr.mxu0 0.0
        %1135 = vmatpush2.xpose.msra.mxu0 0.0
        %1136 = vmatprep.subr.mxu0 0.0
        %1137 = vmatpush2.xpose.msra.mxu0 0.0
        %1138 = vmatprep.subr.mxu0 0.0
        %1139 = vmatpush2.xpose.msra.mxu0 0.0
        %1140 = vmatprep.subr.mxu0 0.0
        %1141 = vmatpush2.xpose.msra.mxu0 0.0
        %1142 = vmatprep.subr.mxu0 0.0
        %1143 = vmatpush2.xpose.msra.mxu0 0.0
        %1144 = vmatprep.subr.mxu0 0.0
        %1145 = vmatpush2.xpose.msra.mxu0 0.0
        %1146 = vmatprep.subr.mxu0 0.0
        %1147 = vmatpush2.xpose.msra.mxu0 0.0
        %1148 = vmatprep.subr.mxu0 0.0
        %1149 = vmatpush2.xpose.msra.mxu0 0.0
        %1150 = vmatprep.subr.mxu0 0.0
        %1151 = vmatpush2.xpose.msra.mxu0 0.0
        %1152 = vmatprep.subr.mxu0 0.0
        %1153 = vmatpush2.xpose.msra.mxu0 0.0
        %1154 = vmatprep.subr.mxu0 0.0
        %1155 = vmatpush2.xpose.msra.mxu0 0.0
        %1156 = vmatprep.subr.mxu0 0.0
        %1157 = vmatpush2.xpose.msra.mxu0 0.0
        %1158 = vmatprep.subr.mxu0 0.0
        %1159 = vmatpush2.xpose.msra.mxu0 0.0
        %1160 = vmatprep.mubr.f32.mxu0 0.0
        %1161 = vmatmul.mubr.f32.gmra.mxu0 %v1092
        %v1162 = vpop.f32.mrf.mxu0
        %v1163 = vadd.f32 0.0, %v1162
        %v1164 = vpop.f32.mrf.mxu0
        %1165 = vdwg.mxu0
        %v1166 = vsel %vm440, %v1163, -inf
        %1167 = vmax.xlane.f32.xlu0 %v1166
        %v1168 = vpop.xlane.xlu0 %1167
        %v1169 = vsub.f32 %v1163, %v1168
        %v1170 = vmul.f32 %v1169, 1.442695
        %v1171 = vpow.pop %v1170
        %v1172 = vsel %vm440, %v1171, 0.0
        %1173 = vadd.xlane.f32.xlu0 %v1172
        %v1174 = vpop.xlane.xlu0 %1173
        %v1175 = vrcp.pop %v1174
        %v1176 = vmul.f32 %v1171, %v1175
        %1177 = vrot.lane.b32.xlu0 %v357, 52
        %v1178 = vpop.permute.xlu0 %1177
        %v1181 = vsel %vm440, %v1176, 0
        %1183 = vmatprep.subr.mxu0 0.0
        %1184 = vmatpush1.msra.mxu0 0.0
        %1185 = vmatprep.subr.mxu0 0.0
        %1186 = vmatpush1.msra.mxu0 0.0
        %1187 = vmatprep.subr.mxu0 0.0
        %1188 = vmatpush1.msra.mxu0 0.0
        %1189 = vmatprep.subr.mxu0 0.0
        %1190 = vmatpush1.msra.mxu0 0.0
        %1191 = vmatprep.subr.mxu0 0.0
        %1192 = vmatpush1.msra.mxu0 0.0
        %1193 = vmatprep.subr.mxu0 0.0
        %1194 = vmatpush1.msra.mxu0 0.0
        %1195 = vmatprep.subr.mxu0 0.0
        %1196 = vmatpush1.msra.mxu0 0.0
        %1197 = vmatprep.subr.mxu0 0.0
        %1198 = vmatpush1.msra.mxu0 0.0
        %1199 = vmatprep.subr.mxu0 0.0
        %1200 = vmatpush1.msra.mxu0 0.0
        %1201 = vmatprep.subr.mxu0 0.0
        %1202 = vmatpush1.msra.mxu0 0.0
        %1203 = vmatprep.subr.mxu0 0.0
        %1204 = vmatpush1.msra.mxu0 0.0
        %1205 = vmatprep.subr.mxu0 0.0
        %1206 = vmatpush1.msra.mxu0 0.0
        %1207 = vmatprep.subr.mxu0 0.0
        %1208 = vmatpush1.msra.mxu0 0.0
        %1209 = vmatprep.subr.mxu0 0.0
        %1210 = vmatpush1.msra.mxu0 0.0
        %1211 = vmatprep.subr.mxu0 0.0
        %1212 = vmatpush1.msra.mxu0 0.0
        %1213 = vmatprep.subr.mxu0 0.0
        %1214 = vmatpush1.msra.mxu0 %v1178
        %1215 = vmatprep.subr.mxu0 0.0
        %1216 = vmatpush2.msra.mxu0 0.0
        %1217 = vmatprep.subr.mxu0 0.0
        %1218 = vmatpush2.msra.mxu0 0.0
        %1219 = vmatprep.subr.mxu0 0.0
        %1220 = vmatpush2.msra.mxu0 0.0
        %1221 = vmatprep.subr.mxu0 0.0
        %1222 = vmatpush2.msra.mxu0 0.0
        %1223 = vmatprep.subr.mxu0 0.0
        %1224 = vmatpush2.msra.mxu0 0.0
        %1225 = vmatprep.subr.mxu0 0.0
        %1226 = vmatpush2.msra.mxu0 0.0
        %1227 = vmatprep.subr.mxu0 0.0
        %1228 = vmatpush2.msra.mxu0 0.0
        %1229 = vmatprep.subr.mxu0 0.0
        %1230 = vmatpush2.msra.mxu0 0.0
        %1231 = vmatprep.subr.mxu0 0.0
        %1232 = vmatpush2.msra.mxu0 0.0
        %1233 = vmatprep.subr.mxu0 0.0
        %1234 = vmatpush2.msra.mxu0 0.0
        %1235 = vmatprep.subr.mxu0 0.0
        %1236 = vmatpush2.msra.mxu0 0.0
        %1237 = vmatprep.subr.mxu0 0.0
        %1238 = vmatpush2.msra.mxu0 0.0
        %1239 = vmatprep.subr.mxu0 0.0
        %1240 = vmatpush2.msra.mxu0 0.0
        %1241 = vmatprep.subr.mxu0 0.0
        %1242 = vmatpush2.msra.mxu0 0.0
        %1243 = vmatprep.subr.mxu0 0.0
        %1244 = vmatpush2.msra.mxu0 0.0
        %1245 = vmatprep.subr.mxu0 0.0
        %1246 = vmatpush2.msra.mxu0 0.0
        %1247 = vmatprep.mubr.f32.mxu0 0.0
        %1248 = vmatmul.mubr.f32.gmra.mxu0 %v1181
        %v1249 = vpop.f32.mrf.mxu0
        %v1250 = vadd.f32 0.0, %v1249
        %v1251 = vpop.f32.mrf.mxu0
        %1252 = vdwg.mxu0
        %v1253 = vrot.slane %v276, 4
        %v1255 = vsel %vm364, %v1250, 0
        %v1257 = vsel %vm698, %v1253, 0
        %1259 = vmatprep.subr.mxu0 0.0
        %1260 = vmatpush1.msra.mxu0 0.0
        %1261 = vmatprep.subr.mxu0 0.0
        %1262 = vmatpush1.msra.mxu0 0.0
        %1263 = vmatprep.subr.mxu0 0.0
        %1264 = vmatpush1.msra.mxu0 0.0
        %1265 = vmatprep.subr.mxu0 0.0
        %1266 = vmatpush1.msra.mxu0 0.0
        %1267 = vmatprep.subr.mxu0 0.0
        %1268 = vmatpush1.msra.mxu0 0.0
        %1269 = vmatprep.subr.mxu0 0.0
        %1270 = vmatpush1.msra.mxu0 0.0
        %1271 = vmatprep.subr.mxu0 0.0
        %1272 = vmatpush1.msra.mxu0 0.0
        %1273 = vmatprep.subr.mxu0 0.0
        %1274 = vmatpush1.msra.mxu0 0.0
        %1275 = vmatprep.subr.mxu0 0.0
        %1276 = vmatpush1.msra.mxu0 0.0
        %1277 = vmatprep.subr.mxu0 0.0
        %1278 = vmatpush1.msra.mxu0 0.0
        %1279 = vmatprep.subr.mxu0 0.0
        %1280 = vmatpush1.msra.mxu0 0.0
        %1281 = vmatprep.subr.mxu0 0.0
        %1282 = vmatpush1.msra.mxu0 0.0
        %1283 = vmatprep.subr.mxu0 0.0
        %1284 = vmatpush1.msra.mxu0 0.0
        %1285 = vmatprep.subr.mxu0 0.0
        %1286 = vmatpush1.msra.mxu0 0.0
        %1287 = vmatprep.subr.mxu0 0.0
        %1288 = vmatpush1.msra.mxu0 0.0
        %1289 = vmatprep.subr.mxu0 0.0
        %1290 = vmatpush1.msra.mxu0 %v1257
        %1291 = vmatprep.subr.mxu0 0.0
        %1292 = vmatpush2.msra.mxu0 0.0
        %1293 = vmatprep.subr.mxu0 0.0
        %1294 = vmatpush2.msra.mxu0 0.0
        %1295 = vmatprep.subr.mxu0 0.0
        %1296 = vmatpush2.msra.mxu0 0.0
        %1297 = vmatprep.subr.mxu0 0.0
        %1298 = vmatpush2.msra.mxu0 0.0
        %1299 = vmatprep.subr.mxu0 0.0
        %1300 = vmatpush2.msra.mxu0 0.0
        %1301 = vmatprep.subr.mxu0 0.0
        %1302 = vmatpush2.msra.mxu0 0.0
        %1303 = vmatprep.subr.mxu0 0.0
        %1304 = vmatpush2.msra.mxu0 0.0
        %1305 = vmatprep.subr.mxu0 0.0
        %1306 = vmatpush2.msra.mxu0 0.0
        %1307 = vmatprep.subr.mxu0 0.0
        %1308 = vmatpush2.msra.mxu0 0.0
        %1309 = vmatprep.subr.mxu0 0.0
        %1310 = vmatpush2.msra.mxu0 0.0
        %1311 = vmatprep.subr.mxu0 0.0
        %1312 = vmatpush2.msra.mxu0 0.0
        %1313 = vmatprep.subr.mxu0 0.0
        %1314 = vmatpush2.msra.mxu0 0.0
        %1315 = vmatprep.subr.mxu0 0.0
        %1316 = vmatpush2.msra.mxu0 0.0
        %1317 = vmatprep.subr.mxu0 0.0
        %1318 = vmatpush2.msra.mxu0 0.0
        %1319 = vmatprep.subr.mxu0 0.0
        %1320 = vmatpush2.msra.mxu0 0.0
        %1321 = vmatprep.subr.mxu0 0.0
        %1322 = vmatpush2.msra.mxu0 0.0
        %1323 = vmatprep.mubr.f32.mxu0 0.0
        %1324 = vmatmul.mubr.f32.gmra.mxu0 %v1255
        %v1325 = vpop.f32.mrf.mxu0
        %v1326 = vadd.f32 0.0, %v1325
        %v1327 = vpop.f32.mrf.mxu0
        %1328 = vdwg.mxu0
        %v1329 = vadd.f32 %v1087, %v1326
        %1330 = vrot.lane.b32.xlu0 %v360, 112
        %v1331 = vpop.permute.xlu0 %1330
        %1332 = vrot.lane.b32.xlu0 %v357, 80
        %v1333 = vpop.permute.xlu0 %1332
        %v1334 = vsel %vm364, %v1331, 0
        %v1336 = vsel %vm364, %v1333, 0
        %1338 = vmatprep.subr.mxu0 0.0
        %1339 = vmatpush1.xpose.msra.mxu0 0.0
        %1340 = vmatprep.subr.mxu0 0.0
        %1341 = vmatpush1.xpose.msra.mxu0 0.0
        %1342 = vmatprep.subr.mxu0 0.0
        %1343 = vmatpush1.xpose.msra.mxu0 0.0
        %1344 = vmatprep.subr.mxu0 0.0
        %1345 = vmatpush1.xpose.msra.mxu0 0.0
        %1346 = vmatprep.subr.mxu0 0.0
        %1347 = vmatpush1.xpose.msra.mxu0 0.0
        %1348 = vmatprep.subr.mxu0 0.0
        %1349 = vmatpush1.xpose.msra.mxu0 0.0
        %1350 = vmatprep.subr.mxu0 0.0
        %1351 = vmatpush1.xpose.msra.mxu0 0.0
        %1352 = vmatprep.subr.mxu0 0.0
        %1353 = vmatpush1.xpose.msra.mxu0 0.0
        %1354 = vmatprep.subr.mxu0 0.0
        %1355 = vmatpush1.xpose.msra.mxu0 0.0
        %1356 = vmatprep.subr.mxu0 0.0
        %1357 = vmatpush1.xpose.msra.mxu0 0.0
        %1358 = vmatprep.subr.mxu0 0.0
        %1359 = vmatpush1.xpose.msra.mxu0 0.0
        %1360 = vmatprep.subr.mxu0 0.0
        %1361 = vmatpush1.xpose.msra.mxu0 0.0
        %1362 = vmatprep.subr.mxu0 0.0
        %1363 = vmatpush1.xpose.msra.mxu0 0.0
        %1364 = vmatprep.subr.mxu0 0.0
        %1365 = vmatpush1.xpose.msra.mxu0 0.0
        %1366 = vmatprep.subr.mxu0 0.0
        %1367 = vmatpush1.xpose.msra.mxu0 0.0
        %1368 = vmatprep.subr.mxu0 0.0
        %1369 = vmatpush1.xpose.msra.mxu0 %v1336
        %1370 = vmatprep.subr.mxu0 0.0
        %1371 = vmatpush2.xpose.msra.mxu0 0.0
        %1372 = vmatprep.subr.mxu0 0.0
        %1373 = vmatpush2.xpose.msra.mxu0 0.0
        %1374 = vmatprep.subr.mxu0 0.0
        %1375 = vmatpush2.xpose.msra.mxu0 0.0
        %1376 = vmatprep.subr.mxu0 0.0
        %1377 = vmatpush2.xpose.msra.mxu0 0.0
        %1378 = vmatprep.subr.mxu0 0.0
        %1379 = vmatpush2.xpose.msra.mxu0 0.0
        %1380 = vmatprep.subr.mxu0 0.0
        %1381 = vmatpush2.xpose.msra.mxu0 0.0
        %1382 = vmatprep.subr.mxu0 0.0
        %1383 = vmatpush2.xpose.msra.mxu0 0.0
        %1384 = vmatprep.subr.mxu0 0.0
        %1385 = vmatpush2.xpose.msra.mxu0 0.0
        %1386 = vmatprep.subr.mxu0 0.0
        %1387 = vmatpush2.xpose.msra.mxu0 0.0
        %1388 = vmatprep.subr.mxu0 0.0
        %1389 = vmatpush2.xpose.msra.mxu0 0.0
        %1390 = vmatprep.subr.mxu0 0.0
        %1391 = vmatpush2.xpose.msra.mxu0 0.0
        %1392 = vmatprep.subr.mxu0 0.0
        %1393 = vmatpush2.xpose.msra.mxu0 0.0
        %1394 = vmatprep.subr.mxu0 0.0
        %1395 = vmatpush2.xpose.msra.mxu0 0.0
        %1396 = vmatprep.subr.mxu0 0.0
        %1397 = vmatpush2.xpose.msra.mxu0 0.0
        %1398 = vmatprep.subr.mxu0 0.0
        %1399 = vmatpush2.xpose.msra.mxu0 0.0
        %1400 = vmatprep.subr.mxu0 0.0
        %1401 = vmatpush2.xpose.msra.mxu0 0.0
        %1402 = vmatprep.mubr.f32.mxu0 0.0
        %1403 = vmatmul.mubr.f32.gmra.mxu0 %v1334
        %v1404 = vpop.f32.mrf.mxu0
        %v1405 = vadd.f32 0.0, %v1404
        %v1406 = vpop.f32.mrf.mxu0
        %1407 = vdwg.mxu0
        %v1408 = vsel %vm440, %v1405, -inf
        %1409 = vmax.xlane.f32.xlu0 %v1408
        %v1410 = vpop.xlane.xlu0 %1409
        %v1411 = vsub.f32 %v1405, %v1410
        %v1412 = vmul.f32 %v1411, 1.442695
        %v1413 = vpow.pop %v1412
        %v1414 = vsel %vm440, %v1413, 0.0
        %1415 = vadd.xlane.f32.xlu0 %v1414
        %v1416 = vpop.xlane.xlu0 %1415
        %v1417 = vrcp.pop %v1416
        %v1418 = vmul.f32 %v1413, %v1417
        %1419 = vrot.lane.b32.xlu0 %v357, 48
        %v1420 = vpop.permute.xlu0 %1419
        %v1423 = vsel %vm440, %v1418, 0
        %1425 = vmatprep.subr.mxu0 0.0
        %1426 = vmatpush1.msra.mxu0 0.0
        %1427 = vmatprep.subr.mxu0 0.0
        %1428 = vmatpush1.msra.mxu0 0.0
        %1429 = vmatprep.subr.mxu0 0.0
        %1430 = vmatpush1.msra.mxu0 0.0
        %1431 = vmatprep.subr.mxu0 0.0
        %1432 = vmatpush1.msra.mxu0 0.0
        %1433 = vmatprep.subr.mxu0 0.0
        %1434 = vmatpush1.msra.mxu0 0.0
        %1435 = vmatprep.subr.mxu0 0.0
        %1436 = vmatpush1.msra.mxu0 0.0
        %1437 = vmatprep.subr.mxu0 0.0
        %1438 = vmatpush1.msra.mxu0 0.0
        %1439 = vmatprep.subr.mxu0 0.0
        %1440 = vmatpush1.msra.mxu0 0.0
        %1441 = vmatprep.subr.mxu0 0.0
        %1442 = vmatpush1.msra.mxu0 0.0
        %1443 = vmatprep.subr.mxu0 0.0
        %1444 = vmatpush1.msra.mxu0 0.0
        %1445 = vmatprep.subr.mxu0 0.0
        %1446 = vmatpush1.msra.mxu0 0.0
        %1447 = vmatprep.subr.mxu0 0.0
        %1448 = vmatpush1.msra.mxu0 0.0
        %1449 = vmatprep.subr.mxu0 0.0
        %1450 = vmatpush1.msra.mxu0 0.0
        %1451 = vmatprep.subr.mxu0 0.0
        %1452 = vmatpush1.msra.mxu0 0.0
        %1453 = vmatprep.subr.mxu0 0.0
        %1454 = vmatpush1.msra.mxu0 0.0
        %1455 = vmatprep.subr.mxu0 0.0
        %1456 = vmatpush1.msra.mxu0 %v1420
        %1457 = vmatprep.subr.mxu0 0.0
        %1458 = vmatpush2.msra.mxu0 0.0
        %1459 = vmatprep.subr.mxu0 0.0
        %1460 = vmatpush2.msra.mxu0 0.0
        %1461 = vmatprep.subr.mxu0 0.0
        %1462 = vmatpush2.msra.mxu0 0.0
        %1463 = vmatprep.subr.mxu0 0.0
        %1464 = vmatpush2.msra.mxu0 0.0
        %1465 = vmatprep.subr.mxu0 0.0
        %1466 = vmatpush2.msra.mxu0 0.0
        %1467 = vmatprep.subr.mxu0 0.0
        %1468 = vmatpush2.msra.mxu0 0.0
        %1469 = vmatprep.subr.mxu0 0.0
        %1470 = vmatpush2.msra.mxu0 0.0
        %1471 = vmatprep.subr.mxu0 0.0
        %1472 = vmatpush2.msra.mxu0 0.0
        %1473 = vmatprep.subr.mxu0 0.0
        %1474 = vmatpush2.msra.mxu0 0.0
        %1475 = vmatprep.subr.mxu0 0.0
        %1476 = vmatpush2.msra.mxu0 0.0
        %1477 = vmatprep.subr.mxu0 0.0
        %1478 = vmatpush2.msra.mxu0 0.0
        %1479 = vmatprep.subr.mxu0 0.0
        %1480 = vmatpush2.msra.mxu0 0.0
        %1481 = vmatprep.subr.mxu0 0.0
        %1482 = vmatpush2.msra.mxu0 0.0
        %1483 = vmatprep.subr.mxu0 0.0
        %1484 = vmatpush2.msra.mxu0 0.0
        %1485 = vmatprep.subr.mxu0 0.0
        %1486 = vmatpush2.msra.mxu0 0.0
        %1487 = vmatprep.subr.mxu0 0.0
        %1488 = vmatpush2.msra.mxu0 0.0
        %1489 = vmatprep.mubr.f32.mxu0 0.0
        %1490 = vmatmul.mubr.f32.gmra.mxu0 %v1423
        %v1491 = vpop.f32.mrf.mxu0
        %v1492 = vadd.f32 0.0, %v1491
        %v1493 = vpop.f32.mrf.mxu0
        %1494 = vdwg.mxu0
        %v1496 = vsel %vm364, %v1492, 0
        %v1499 = vsel %vm698, %v277, 0
        %1501 = vmatprep.subr.mxu0 0.0
        %1502 = vmatpush1.msra.mxu0 0.0
        %1503 = vmatprep.subr.mxu0 0.0
        %1504 = vmatpush1.msra.mxu0 0.0
        %1505 = vmatprep.subr.mxu0 0.0
        %1506 = vmatpush1.msra.mxu0 0.0
        %1507 = vmatprep.subr.mxu0 0.0
        %1508 = vmatpush1.msra.mxu0 0.0
        %1509 = vmatprep.subr.mxu0 0.0
        %1510 = vmatpush1.msra.mxu0 0.0
        %1511 = vmatprep.subr.mxu0 0.0
        %1512 = vmatpush1.msra.mxu0 0.0
        %1513 = vmatprep.subr.mxu0 0.0
        %1514 = vmatpush1.msra.mxu0 0.0
        %1515 = vmatprep.subr.mxu0 0.0
        %1516 = vmatpush1.msra.mxu0 0.0
        %1517 = vmatprep.subr.mxu0 0.0
        %1518 = vmatpush1.msra.mxu0 0.0
        %1519 = vmatprep.subr.mxu0 0.0
        %1520 = vmatpush1.msra.mxu0 0.0
        %1521 = vmatprep.subr.mxu0 0.0
        %1522 = vmatpush1.msra.mxu0 0.0
        %1523 = vmatprep.subr.mxu0 0.0
        %1524 = vmatpush1.msra.mxu0 0.0
        %1525 = vmatprep.subr.mxu0 0.0
        %1526 = vmatpush1.msra.mxu0 0.0
        %1527 = vmatprep.subr.mxu0 0.0
        %1528 = vmatpush1.msra.mxu0 0.0
        %1529 = vmatprep.subr.mxu0 0.0
        %1530 = vmatpush1.msra.mxu0 0.0
        %1531 = vmatprep.subr.mxu0 0.0
        %1532 = vmatpush1.msra.mxu0 %v1499
        %1533 = vmatprep.subr.mxu0 0.0
        %1534 = vmatpush2.msra.mxu0 0.0
        %1535 = vmatprep.subr.mxu0 0.0
        %1536 = vmatpush2.msra.mxu0 0.0
        %1537 = vmatprep.subr.mxu0 0.0
        %1538 = vmatpush2.msra.mxu0 0.0
        %1539 = vmatprep.subr.mxu0 0.0
        %1540 = vmatpush2.msra.mxu0 0.0
        %1541 = vmatprep.subr.mxu0 0.0
        %1542 = vmatpush2.msra.mxu0 0.0
        %1543 = vmatprep.subr.mxu0 0.0
        %1544 = vmatpush2.msra.mxu0 0.0
        %1545 = vmatprep.subr.mxu0 0.0
        %1546 = vmatpush2.msra.mxu0 0.0
        %1547 = vmatprep.subr.mxu0 0.0
        %1548 = vmatpush2.msra.mxu0 0.0
        %1549 = vmatprep.subr.mxu0 0.0
        %1550 = vmatpush2.msra.mxu0 0.0
        %1551 = vmatprep.subr.mxu0 0.0
        %1552 = vmatpush2.msra.mxu0 0.0
        %1553 = vmatprep.subr.mxu0 0.0
        %1554 = vmatpush2.msra.mxu0 0.0
        %1555 = vmatprep.subr.mxu0 0.0
        %1556 = vmatpush2.msra.mxu0 0.0
        %1557 = vmatprep.subr.mxu0 0.0
        %1558 = vmatpush2.msra.mxu0 0.0
        %1559 = vmatprep.subr.mxu0 0.0
        %1560 = vmatpush2.msra.mxu0 0.0
        %1561 = vmatprep.subr.mxu0 0.0
        %1562 = vmatpush2.msra.mxu0 0.0
        %1563 = vmatprep.subr.mxu0 0.0
        %1564 = vmatpush2.msra.mxu0 0.0
        %1565 = vmatprep.mubr.f32.mxu0 0.0
        %1566 = vmatmul.mubr.f32.gmra.mxu0 %v1496
        %v1567 = vpop.f32.mrf.mxu0
        %v1568 = vadd.f32 0.0, %v1567
        %v1569 = vpop.f32.mrf.mxu0
        %1570 = vdwg.mxu0
        %v1571 = vadd.f32 %v1329, %v1568
        %1572 = vrot.lane.b32.xlu0 %v360, 108
        %v1573 = vpop.permute.xlu0 %1572
        %1574 = vrot.lane.b32.xlu0 %v357, 76
        %v1575 = vpop.permute.xlu0 %1574
        %v1576 = vsel %vm364, %v1573, 0
        %v1578 = vsel %vm364, %v1575, 0
        %1580 = vmatprep.subr.mxu0 0.0
        %1581 = vmatpush1.xpose.msra.mxu0 0.0
        %1582 = vmatprep.subr.mxu0 0.0
        %1583 = vmatpush1.xpose.msra.mxu0 0.0
        %1584 = vmatprep.subr.mxu0 0.0
        %1585 = vmatpush1.xpose.msra.mxu0 0.0
        %1586 = vmatprep.subr.mxu0 0.0
        %1587 = vmatpush1.xpose.msra.mxu0 0.0
        %1588 = vmatprep.subr.mxu0 0.0
        %1589 = vmatpush1.xpose.msra.mxu0 0.0
        %1590 = vmatprep.subr.mxu0 0.0
        %1591 = vmatpush1.xpose.msra.mxu0 0.0
        %1592 = vmatprep.subr.mxu0 0.0
        %1593 = vmatpush1.xpose.msra.mxu0 0.0
        %1594 = vmatprep.subr.mxu0 0.0
        %1595 = vmatpush1.xpose.msra.mxu0 0.0
        %1596 = vmatprep.subr.mxu0 0.0
        %1597 = vmatpush1.xpose.msra.mxu0 0.0
        %1598 = vmatprep.subr.mxu0 0.0
        %1599 = vmatpush1.xpose.msra.mxu0 0.0
        %1600 = vmatprep.subr.mxu0 0.0
        %1601 = vmatpush1.xpose.msra.mxu0 0.0
        %1602 = vmatprep.subr.mxu0 0.0
        %1603 = vmatpush1.xpose.msra.mxu0 0.0
        %1604 = vmatprep.subr.mxu0 0.0
        %1605 = vmatpush1.xpose.msra.mxu0 0.0
        %1606 = vmatprep.subr.mxu0 0.0
        %1607 = vmatpush1.xpose.msra.mxu0 0.0
        %1608 = vmatprep.subr.mxu0 0.0
        %1609 = vmatpush1.xpose.msra.mxu0 0.0
        %1610 = vmatprep.subr.mxu0 0.0
        %1611 = vmatpush1.xpose.msra.mxu0 %v1578
        %1612 = vmatprep.subr.mxu0 0.0
        %1613 = vmatpush2.xpose.msra.mxu0 0.0
        %1614 = vmatprep.subr.mxu0 0.0
        %1615 = vmatpush2.xpose.msra.mxu0 0.0
        %1616 = vmatprep.subr.mxu0 0.0
        %1617 = vmatpush2.xpose.msra.mxu0 0.0
        %1618 = vmatprep.subr.mxu0 0.0
        %1619 = vmatpush2.xpose.msra.mxu0 0.0
        %1620 = vmatprep.subr.mxu0 0.0
        %1621 = vmatpush2.xpose.msra.mxu0 0.0
        %1622 = vmatprep.subr.mxu0 0.0
        %1623 = vmatpush2.xpose.msra.mxu0 0.0
        %1624 = vmatprep.subr.mxu0 0.0
        %1625 = vmatpush2.xpose.msra.mxu0 0.0
        %1626 = vmatprep.subr.mxu0 0.0
        %1627 = vmatpush2.xpose.msra.mxu0 0.0
        %1628 = vmatprep.subr.mxu0 0.0
        %1629 = vmatpush2.xpose.msra.mxu0 0.0
        %1630 = vmatprep.subr.mxu0 0.0
        %1631 = vmatpush2.xpose.msra.mxu0 0.0
        %1632 = vmatprep.subr.mxu0 0.0
        %1633 = vmatpush2.xpose.msra.mxu0 0.0
        %1634 = vmatprep.subr.mxu0 0.0
        %1635 = vmatpush2.xpose.msra.mxu0 0.0
        %1636 = vmatprep.subr.mxu0 0.0
        %1637 = vmatpush2.xpose.msra.mxu0 0.0
        %1638 = vmatprep.subr.mxu0 0.0
        %1639 = vmatpush2.xpose.msra.mxu0 0.0
        %1640 = vmatprep.subr.mxu0 0.0
        %1641 = vmatpush2.xpose.msra.mxu0 0.0
        %1642 = vmatprep.subr.mxu0 0.0
        %1643 = vmatpush2.xpose.msra.mxu0 0.0
        %1644 = vmatprep.mubr.f32.mxu0 0.0
        %1645 = vmatmul.mubr.f32.gmra.mxu0 %v1576
        %v1646 = vpop.f32.mrf.mxu0
        %v1647 = vadd.f32 0.0, %v1646
        %v1648 = vpop.f32.mrf.mxu0
        %1649 = vdwg.mxu0
        %v1650 = vsel %vm440, %v1647, -inf
        %1651 = vmax.xlane.f32.xlu0 %v1650
        %v1652 = vpop.xlane.xlu0 %1651
        %v1653 = vsub.f32 %v1647, %v1652
        %v1654 = vmul.f32 %v1653, 1.442695
        %v1655 = vpow.pop %v1654
        %v1656 = vsel %vm440, %v1655, 0.0
        %1657 = vadd.xlane.f32.xlu0 %v1656
        %v1658 = vpop.xlane.xlu0 %1657
        %v1659 = vrcp.pop %v1658
        %v1660 = vmul.f32 %v1655, %v1659
        %1661 = vrot.lane.b32.xlu0 %v357, 44
        %v1662 = vpop.permute.xlu0 %1661
        %v1665 = vsel %vm440, %v1660, 0
        %1667 = vmatprep.subr.mxu0 0.0
        %1668 = vmatpush1.msra.mxu0 0.0
        %1669 = vmatprep.subr.mxu0 0.0
        %1670 = vmatpush1.msra.mxu0 0.0
        %1671 = vmatprep.subr.mxu0 0.0
        %1672 = vmatpush1.msra.mxu0 0.0
        %1673 = vmatprep.subr.mxu0 0.0
        %1674 = vmatpush1.msra.mxu0 0.0
        %1675 = vmatprep.subr.mxu0 0.0
        %1676 = vmatpush1.msra.mxu0 0.0
        %1677 = vmatprep.subr.mxu0 0.0
        %1678 = vmatpush1.msra.mxu0 0.0
        %1679 = vmatprep.subr.mxu0 0.0
        %1680 = vmatpush1.msra.mxu0 0.0
        %1681 = vmatprep.subr.mxu0 0.0
        %1682 = vmatpush1.msra.mxu0 0.0
        %1683 = vmatprep.subr.mxu0 0.0
        %1684 = vmatpush1.msra.mxu0 0.0
        %1685 = vmatprep.subr.mxu0 0.0
        %1686 = vmatpush1.msra.mxu0 0.0
        %1687 = vmatprep.subr.mxu0 0.0
        %1688 = vmatpush1.msra.mxu0 0.0
        %1689 = vmatprep.subr.mxu0 0.0
        %1690 = vmatpush1.msra.mxu0 0.0
        %1691 = vmatprep.subr.mxu0 0.0
        %1692 = vmatpush1.msra.mxu0 0.0
        %1693 = vmatprep.subr.mxu0 0.0
        %1694 = vmatpush1.msra.mxu0 0.0
        %1695 = vmatprep.subr.mxu0 0.0
        %1696 = vmatpush1.msra.mxu0 0.0
        %1697 = vmatprep.subr.mxu0 0.0
        %1698 = vmatpush1.msra.mxu0 %v1662
        %1699 = vmatprep.subr.mxu0 0.0
        %1700 = vmatpush2.msra.mxu0 0.0
        %1701 = vmatprep.subr.mxu0 0.0
        %1702 = vmatpush2.msra.mxu0 0.0
        %1703 = vmatprep.subr.mxu0 0.0
        %1704 = vmatpush2.msra.mxu0 0.0
        %1705 = vmatprep.subr.mxu0 0.0
        %1706 = vmatpush2.msra.mxu0 0.0
        %1707 = vmatprep.subr.mxu0 0.0
        %1708 = vmatpush2.msra.mxu0 0.0
        %1709 = vmatprep.subr.mxu0 0.0
        %1710 = vmatpush2.msra.mxu0 0.0
        %1711 = vmatprep.subr.mxu0 0.0
        %1712 = vmatpush2.msra.mxu0 0.0
        %1713 = vmatprep.subr.mxu0 0.0
        %1714 = vmatpush2.msra.mxu0 0.0
        %1715 = vmatprep.subr.mxu0 0.0
        %1716 = vmatpush2.msra.mxu0 0.0
        %1717 = vmatprep.subr.mxu0 0.0
        %1718 = vmatpush2.msra.mxu0 0.0
        %1719 = vmatprep.subr.mxu0 0.0
        %1720 = vmatpush2.msra.mxu0 0.0
        %1721 = vmatprep.subr.mxu0 0.0
        %1722 = vmatpush2.msra.mxu0 0.0
        %1723 = vmatprep.subr.mxu0 0.0
        %1724 = vmatpush2.msra.mxu0 0.0
        %1725 = vmatprep.subr.mxu0 0.0
        %1726 = vmatpush2.msra.mxu0 0.0
        %1727 = vmatprep.subr.mxu0 0.0
        %1728 = vmatpush2.msra.mxu0 0.0
        %1729 = vmatprep.subr.mxu0 0.0
        %1730 = vmatpush2.msra.mxu0 0.0
        %1731 = vmatprep.mubr.f32.mxu0 0.0
        %1732 = vmatmul.mubr.f32.gmra.mxu0 %v1665
        %v1733 = vpop.f32.mrf.mxu0
        %v1734 = vadd.f32 0.0, %v1733
        %v1735 = vpop.f32.mrf.mxu0
        %1736 = vdwg.mxu0
        %v1737 = vrot.slane %v277, 4
        %v1739 = vsel %vm364, %v1734, 0
        %v1741 = vsel %vm698, %v1737, 0
        %1743 = vmatprep.subr.mxu0 0.0
        %1744 = vmatpush1.msra.mxu0 0.0
        %1745 = vmatprep.subr.mxu0 0.0
        %1746 = vmatpush1.msra.mxu0 0.0
        %1747 = vmatprep.subr.mxu0 0.0
        %1748 = vmatpush1.msra.mxu0 0.0
        %1749 = vmatprep.subr.mxu0 0.0
        %1750 = vmatpush1.msra.mxu0 0.0
        %1751 = vmatprep.subr.mxu0 0.0
        %1752 = vmatpush1.msra.mxu0 0.0
        %1753 = vmatprep.subr.mxu0 0.0
        %1754 = vmatpush1.msra.mxu0 0.0
        %1755 = vmatprep.subr.mxu0 0.0
        %1756 = vmatpush1.msra.mxu0 0.0
        %1757 = vmatprep.subr.mxu0 0.0
        %1758 = vmatpush1.msra.mxu0 0.0
        %1759 = vmatprep.subr.mxu0 0.0
        %1760 = vmatpush1.msra.mxu0 0.0
        %1761 = vmatprep.subr.mxu0 0.0
        %1762 = vmatpush1.msra.mxu0 0.0
        %1763 = vmatprep.subr.mxu0 0.0
        %1764 = vmatpush1.msra.mxu0 0.0
        %1765 = vmatprep.subr.mxu0 0.0
        %1766 = vmatpush1.msra.mxu0 0.0
        %1767 = vmatprep.subr.mxu0 0.0
        %1768 = vmatpush1.msra.mxu0 0.0
        %1769 = vmatprep.subr.mxu0 0.0
        %1770 = vmatpush1.msra.mxu0 0.0
        %1771 = vmatprep.subr.mxu0 0.0
        %1772 = vmatpush1.msra.mxu0 0.0
        %1773 = vmatprep.subr.mxu0 0.0
        %1774 = vmatpush1.msra.mxu0 %v1741
        %1775 = vmatprep.subr.mxu0 0.0
        %1776 = vmatpush2.msra.mxu0 0.0
        %1777 = vmatprep.subr.mxu0 0.0
        %1778 = vmatpush2.msra.mxu0 0.0
        %1779 = vmatprep.subr.mxu0 0.0
        %1780 = vmatpush2.msra.mxu0 0.0
        %1781 = vmatprep.subr.mxu0 0.0
        %1782 = vmatpush2.msra.mxu0 0.0
        %1783 = vmatprep.subr.mxu0 0.0
        %1784 = vmatpush2.msra.mxu0 0.0
        %1785 = vmatprep.subr.mxu0 0.0
        %1786 = vmatpush2.msra.mxu0 0.0
        %1787 = vmatprep.subr.mxu0 0.0
        %1788 = vmatpush2.msra.mxu0 0.0
        %1789 = vmatprep.subr.mxu0 0.0
        %1790 = vmatpush2.msra.mxu0 0.0
        %1791 = vmatprep.subr.mxu0 0.0
        %1792 = vmatpush2.msra.mxu0 0.0
        %1793 = vmatprep.subr.mxu0 0.0
        %1794 = vmatpush2.msra.mxu0 0.0
        %1795 = vmatprep.subr.mxu0 0.0
        %1796 = vmatpush2.msra.mxu0 0.0
        %1797 = vmatprep.subr.mxu0 0.0
        %1798 = vmatpush2.msra.mxu0 0.0
        %1799 = vmatprep.subr.mxu0 0.0
        %1800 = vmatpush2.msra.mxu0 0.0
        %1801 = vmatprep.subr.mxu0 0.0
        %1802 = vmatpush2.msra.mxu0 0.0
        %1803 = vmatprep.subr.mxu0 0.0
        %1804 = vmatpush2.msra.mxu0 0.0
        %1805 = vmatprep.subr.mxu0 0.0
        %1806 = vmatpush2.msra.mxu0 0.0
        %1807 = vmatprep.mubr.f32.mxu0 0.0
        %1808 = vmatmul.mubr.f32.gmra.mxu0 %v1739
        %v1809 = vpop.f32.mrf.mxu0
        %v1810 = vadd.f32 0.0, %v1809
        %v1811 = vpop.f32.mrf.mxu0
        %1812 = vdwg.mxu0
        %v1813 = vadd.f32 %v1571, %v1810
        %1814 = vrot.lane.b32.xlu0 %v360, 104
        %v1815 = vpop.permute.xlu0 %1814
        %1816 = vrot.lane.b32.xlu0 %v357, 72
        %v1817 = vpop.permute.xlu0 %1816
        %v1818 = vsel %vm364, %v1815, 0
        %v1820 = vsel %vm364, %v1817, 0
        %1822 = vmatprep.subr.mxu0 0.0
        %1823 = vmatpush1.xpose.msra.mxu0 0.0
        %1824 = vmatprep.subr.mxu0 0.0
        %1825 = vmatpush1.xpose.msra.mxu0 0.0
        %1826 = vmatprep.subr.mxu0 0.0
        %1827 = vmatpush1.xpose.msra.mxu0 0.0
        %1828 = vmatprep.subr.mxu0 0.0
        %1829 = vmatpush1.xpose.msra.mxu0 0.0
        %1830 = vmatprep.subr.mxu0 0.0
        %1831 = vmatpush1.xpose.msra.mxu0 0.0
        %1832 = vmatprep.subr.mxu0 0.0
        %1833 = vmatpush1.xpose.msra.mxu0 0.0
        %1834 = vmatprep.subr.mxu0 0.0
        %1835 = vmatpush1.xpose.msra.mxu0 0.0
        %1836 = vmatprep.subr.mxu0 0.0
        %1837 = vmatpush1.xpose.msra.mxu0 0.0
        %1838 = vmatprep.subr.mxu0 0.0
        %1839 = vmatpush1.xpose.msra.mxu0 0.0
        %1840 = vmatprep.subr.mxu0 0.0
        %1841 = vmatpush1.xpose.msra.mxu0 0.0
        %1842 = vmatprep.subr.mxu0 0.0
        %1843 = vmatpush1.xpose.msra.mxu0 0.0
        %1844 = vmatprep.subr.mxu0 0.0
        %1845 = vmatpush1.xpose.msra.mxu0 0.0
        %1846 = vmatprep.subr.mxu0 0.0
        %1847 = vmatpush1.xpose.msra.mxu0 0.0
        %1848 = vmatprep.subr.mxu0 0.0
        %1849 = vmatpush1.xpose.msra.mxu0 0.0
        %1850 = vmatprep.subr.mxu0 0.0
        %1851 = vmatpush1.xpose.msra.mxu0 0.0
        %1852 = vmatprep.subr.mxu0 0.0
        %1853 = vmatpush1.xpose.msra.mxu0 %v1820
        %1854 = vmatprep.subr.mxu0 0.0
        %1855 = vmatpush2.xpose.msra.mxu0 0.0
        %1856 = vmatprep.subr.mxu0 0.0
        %1857 = vmatpush2.xpose.msra.mxu0 0.0
        %1858 = vmatprep.subr.mxu0 0.0
        %1859 = vmatpush2.xpose.msra.mxu0 0.0
        %1860 = vmatprep.subr.mxu0 0.0
        %1861 = vmatpush2.xpose.msra.mxu0 0.0
        %1862 = vmatprep.subr.mxu0 0.0
        %1863 = vmatpush2.xpose.msra.mxu0 0.0
        %1864 = vmatprep.subr.mxu0 0.0
        %1865 = vmatpush2.xpose.msra.mxu0 0.0
        %1866 = vmatprep.subr.mxu0 0.0
        %1867 = vmatpush2.xpose.msra.mxu0 0.0
        %1868 = vmatprep.subr.mxu0 0.0
        %1869 = vmatpush2.xpose.msra.mxu0 0.0
        %1870 = vmatprep.subr.mxu0 0.0
        %1871 = vmatpush2.xpose.msra.mxu0 0.0
        %1872 = vmatprep.subr.mxu0 0.0
        %1873 = vmatpush2.xpose.msra.mxu0 0.0
        %1874 = vmatprep.subr.mxu0 0.0
        %1875 = vmatpush2.xpose.msra.mxu0 0.0
        %1876 = vmatprep.subr.mxu0 0.0
        %1877 = vmatpush2.xpose.msra.mxu0 0.0
        %1878 = vmatprep.subr.mxu0 0.0
        %1879 = vmatpush2.xpose.msra.mxu0 0.0
        %1880 = vmatprep.subr.mxu0 0.0
        %1881 = vmatpush2.xpose.msra.mxu0 0.0
        %1882 = vmatprep.subr.mxu0 0.0
        %1883 = vmatpush2.xpose.msra.mxu0 0.0
        %1884 = vmatprep.subr.mxu0 0.0
        %1885 = vmatpush2.xpose.msra.mxu0 0.0
        %1886 = vmatprep.mubr.f32.mxu0 0.0
        %1887 = vmatmul.mubr.f32.gmra.mxu0 %v1818
        %v1888 = vpop.f32.mrf.mxu0
        %v1889 = vadd.f32 0.0, %v1888
        %v1890 = vpop.f32.mrf.mxu0
        %1891 = vdwg.mxu0
        %v1892 = vsel %vm440, %v1889, -inf
        %1893 = vmax.xlane.f32.xlu0 %v1892
        %v1894 = vpop.xlane.xlu0 %1893
        %v1895 = vsub.f32 %v1889, %v1894
        %v1896 = vmul.f32 %v1895, 1.442695
        %v1897 = vpow.pop %v1896
        %v1898 = vsel %vm440, %v1897, 0.0
        %1899 = vadd.xlane.f32.xlu0 %v1898
        %v1900 = vpop.xlane.xlu0 %1899
        %v1901 = vrcp.pop %v1900
        %v1902 = vmul.f32 %v1897, %v1901
        %1903 = vrot.lane.b32.xlu0 %v357, 40
        %v1904 = vpop.permute.xlu0 %1903
        %v1907 = vsel %vm440, %v1902, 0
        %1909 = vmatprep.subr.mxu0 0.0
        %1910 = vmatpush1.msra.mxu0 0.0
        %1911 = vmatprep.subr.mxu0 0.0
        %1912 = vmatpush1.msra.mxu0 0.0
        %1913 = vmatprep.subr.mxu0 0.0
        %1914 = vmatpush1.msra.mxu0 0.0
        %1915 = vmatprep.subr.mxu0 0.0
        %1916 = vmatpush1.msra.mxu0 0.0
        %1917 = vmatprep.subr.mxu0 0.0
        %1918 = vmatpush1.msra.mxu0 0.0
        %1919 = vmatprep.subr.mxu0 0.0
        %1920 = vmatpush1.msra.mxu0 0.0
        %1921 = vmatprep.subr.mxu0 0.0
        %1922 = vmatpush1.msra.mxu0 0.0
        %1923 = vmatprep.subr.mxu0 0.0
        %1924 = vmatpush1.msra.mxu0 0.0
        %1925 = vmatprep.subr.mxu0 0.0
        %1926 = vmatpush1.msra.mxu0 0.0
        %1927 = vmatprep.subr.mxu0 0.0
        %1928 = vmatpush1.msra.mxu0 0.0
        %1929 = vmatprep.subr.mxu0 0.0
        %1930 = vmatpush1.msra.mxu0 0.0
        %1931 = vmatprep.subr.mxu0 0.0
        %1932 = vmatpush1.msra.mxu0 0.0
        %1933 = vmatprep.subr.mxu0 0.0
        %1934 = vmatpush1.msra.mxu0 0.0
        %1935 = vmatprep.subr.mxu0 0.0
        %1936 = vmatpush1.msra.mxu0 0.0
        %1937 = vmatprep.subr.mxu0 0.0
        %1938 = vmatpush1.msra.mxu0 0.0
        %1939 = vmatprep.subr.mxu0 0.0
        %1940 = vmatpush1.msra.mxu0 %v1904
        %1941 = vmatprep.subr.mxu0 0.0
        %1942 = vmatpush2.msra.mxu0 0.0
        %1943 = vmatprep.subr.mxu0 0.0
        %1944 = vmatpush2.msra.mxu0 0.0
        %1945 = vmatprep.subr.mxu0 0.0
        %1946 = vmatpush2.msra.mxu0 0.0
        %1947 = vmatprep.subr.mxu0 0.0
        %1948 = vmatpush2.msra.mxu0 0.0
        %1949 = vmatprep.subr.mxu0 0.0
        %1950 = vmatpush2.msra.mxu0 0.0
        %1951 = vmatprep.subr.mxu0 0.0
        %1952 = vmatpush2.msra.mxu0 0.0
        %1953 = vmatprep.subr.mxu0 0.0
        %1954 = vmatpush2.msra.mxu0 0.0
        %1955 = vmatprep.subr.mxu0 0.0
        %1956 = vmatpush2.msra.mxu0 0.0
        %1957 = vmatprep.subr.mxu0 0.0
        %1958 = vmatpush2.msra.mxu0 0.0
        %1959 = vmatprep.subr.mxu0 0.0
        %1960 = vmatpush2.msra.mxu0 0.0
        %1961 = vmatprep.subr.mxu0 0.0
        %1962 = vmatpush2.msra.mxu0 0.0
        %1963 = vmatprep.subr.mxu0 0.0
        %1964 = vmatpush2.msra.mxu0 0.0
        %1965 = vmatprep.subr.mxu0 0.0
        %1966 = vmatpush2.msra.mxu0 0.0
        %1967 = vmatprep.subr.mxu0 0.0
        %1968 = vmatpush2.msra.mxu0 0.0
        %1969 = vmatprep.subr.mxu0 0.0
        %1970 = vmatpush2.msra.mxu0 0.0
        %1971 = vmatprep.subr.mxu0 0.0
        %1972 = vmatpush2.msra.mxu0 0.0
        %1973 = vmatprep.mubr.f32.mxu0 0.0
        %1974 = vmatmul.mubr.f32.gmra.mxu0 %v1907
        %v1975 = vpop.f32.mrf.mxu0
        %v1976 = vadd.f32 0.0, %v1975
        %v1977 = vpop.f32.mrf.mxu0
        %1978 = vdwg.mxu0
        %v1980 = vsel %vm364, %v1976, 0
        %v1983 = vsel %vm698, %v278, 0
        %1985 = vmatprep.subr.mxu0 0.0
        %1986 = vmatpush1.msra.mxu0 0.0
        %1987 = vmatprep.subr.mxu0 0.0
        %1988 = vmatpush1.msra.mxu0 0.0
        %1989 = vmatprep.subr.mxu0 0.0
        %1990 = vmatpush1.msra.mxu0 0.0
        %1991 = vmatprep.subr.mxu0 0.0
        %1992 = vmatpush1.msra.mxu0 0.0
        %1993 = vmatprep.subr.mxu0 0.0
        %1994 = vmatpush1.msra.mxu0 0.0
        %1995 = vmatprep.subr.mxu0 0.0
        %1996 = vmatpush1.msra.mxu0 0.0
        %1997 = vmatprep.subr.mxu0 0.0
        %1998 = vmatpush1.msra.mxu0 0.0
        %1999 = vmatprep.subr.mxu0 0.0
        %2000 = vmatpush1.msra.mxu0 0.0
        %2001 = vmatprep.subr.mxu0 0.0
        %2002 = vmatpush1.msra.mxu0 0.0
        %2003 = vmatprep.subr.mxu0 0.0
        %2004 = vmatpush1.msra.mxu0 0.0
        %2005 = vmatprep.subr.mxu0 0.0
        %2006 = vmatpush1.msra.mxu0 0.0
        %2007 = vmatprep.subr.mxu0 0.0
        %2008 = vmatpush1.msra.mxu0 0.0
        %2009 = vmatprep.subr.mxu0 0.0
        %2010 = vmatpush1.msra.mxu0 0.0
        %2011 = vmatprep.subr.mxu0 0.0
        %2012 = vmatpush1.msra.mxu0 0.0
        %2013 = vmatprep.subr.mxu0 0.0
        %2014 = vmatpush1.msra.mxu0 0.0
        %2015 = vmatprep.subr.mxu0 0.0
        %2016 = vmatpush1.msra.mxu0 %v1983
        %2017 = vmatprep.subr.mxu0 0.0
        %2018 = vmatpush2.msra.mxu0 0.0
        %2019 = vmatprep.subr.mxu0 0.0
        %2020 = vmatpush2.msra.mxu0 0.0
        %2021 = vmatprep.subr.mxu0 0.0
        %2022 = vmatpush2.msra.mxu0 0.0
        %2023 = vmatprep.subr.mxu0 0.0
        %2024 = vmatpush2.msra.mxu0 0.0
        %2025 = vmatprep.subr.mxu0 0.0
        %2026 = vmatpush2.msra.mxu0 0.0
        %2027 = vmatprep.subr.mxu0 0.0
        %2028 = vmatpush2.msra.mxu0 0.0
        %2029 = vmatprep.subr.mxu0 0.0
        %2030 = vmatpush2.msra.mxu0 0.0
        %2031 = vmatprep.subr.mxu0 0.0
        %2032 = vmatpush2.msra.mxu0 0.0
        %2033 = vmatprep.subr.mxu0 0.0
        %2034 = vmatpush2.msra.mxu0 0.0
        %2035 = vmatprep.subr.mxu0 0.0
        %2036 = vmatpush2.msra.mxu0 0.0
        %2037 = vmatprep.subr.mxu0 0.0
        %2038 = vmatpush2.msra.mxu0 0.0
        %2039 = vmatprep.subr.mxu0 0.0
        %2040 = vmatpush2.msra.mxu0 0.0
        %2041 = vmatprep.subr.mxu0 0.0
        %2042 = vmatpush2.msra.mxu0 0.0
        %2043 = vmatprep.subr.mxu0 0.0
        %2044 = vmatpush2.msra.mxu0 0.0
        %2045 = vmatprep.subr.mxu0 0.0
        %2046 = vmatpush2.msra.mxu0 0.0
        %2047 = vmatprep.subr.mxu0 0.0
        %2048 = vmatpush2.msra.mxu0 0.0
        %2049 = vmatprep.mubr.f32.mxu0 0.0
        %2050 = vmatmul.mubr.f32.gmra.mxu0 %v1980
        %v2051 = vpop.f32.mrf.mxu0
        %v2052 = vadd.f32 0.0, %v2051
        %v2053 = vpop.f32.mrf.mxu0
        %2054 = vdwg.mxu0
        %v2055 = vadd.f32 %v1813, %v2052
        %2056 = vrot.lane.b32.xlu0 %v360, 100
        %v2057 = vpop.permute.xlu0 %2056
        %2058 = vrot.lane.b32.xlu0 %v357, 68
        %v2059 = vpop.permute.xlu0 %2058
        %v2060 = vsel %vm364, %v2057, 0
        %v2062 = vsel %vm364, %v2059, 0
        %2064 = vmatprep.subr.mxu0 0.0
        %2065 = vmatpush1.xpose.msra.mxu0 0.0
        %2066 = vmatprep.subr.mxu0 0.0
        %2067 = vmatpush1.xpose.msra.mxu0 0.0
        %2068 = vmatprep.subr.mxu0 0.0
        %2069 = vmatpush1.xpose.msra.mxu0 0.0
        %2070 = vmatprep.subr.mxu0 0.0
        %2071 = vmatpush1.xpose.msra.mxu0 0.0
        %2072 = vmatprep.subr.mxu0 0.0
        %2073 = vmatpush1.xpose.msra.mxu0 0.0
        %2074 = vmatprep.subr.mxu0 0.0
        %2075 = vmatpush1.xpose.msra.mxu0 0.0
        %2076 = vmatprep.subr.mxu0 0.0
        %2077 = vmatpush1.xpose.msra.mxu0 0.0
        %2078 = vmatprep.subr.mxu0 0.0
        %2079 = vmatpush1.xpose.msra.mxu0 0.0
        %2080 = vmatprep.subr.mxu0 0.0
        %2081 = vmatpush1.xpose.msra.mxu0 0.0
        %2082 = vmatprep.subr.mxu0 0.0
        %2083 = vmatpush1.xpose.msra.mxu0 0.0
        %2084 = vmatprep.subr.mxu0 0.0
        %2085 = vmatpush1.xpose.msra.mxu0 0.0
        %2086 = vmatprep.subr.mxu0 0.0
        %2087 = vmatpush1.xpose.msra.mxu0 0.0
        %2088 = vmatprep.subr.mxu0 0.0
        %2089 = vmatpush1.xpose.msra.mxu0 0.0
        %2090 = vmatprep.subr.mxu0 0.0
        %2091 = vmatpush1.xpose.msra.mxu0 0.0
        %2092 = vmatprep.subr.mxu0 0.0
        %2093 = vmatpush1.xpose.msra.mxu0 0.0
        %2094 = vmatprep.subr.mxu0 0.0
        %2095 = vmatpush1.xpose.msra.mxu0 %v2062
        %2096 = vmatprep.subr.mxu0 0.0
        %2097 = vmatpush2.xpose.msra.mxu0 0.0
        %2098 = vmatprep.subr.mxu0 0.0
        %2099 = vmatpush2.xpose.msra.mxu0 0.0
        %2100 = vmatprep.subr.mxu0 0.0
        %2101 = vmatpush2.xpose.msra.mxu0 0.0
        %2102 = vmatprep.subr.mxu0 0.0
        %2103 = vmatpush2.xpose.msra.mxu0 0.0
        %2104 = vmatprep.subr.mxu0 0.0
        %2105 = vmatpush2.xpose.msra.mxu0 0.0
        %2106 = vmatprep.subr.mxu0 0.0
        %2107 = vmatpush2.xpose.msra.mxu0 0.0
        %2108 = vmatprep.subr.mxu0 0.0
        %2109 = vmatpush2.xpose.msra.mxu0 0.0
        %2110 = vmatprep.subr.mxu0 0.0
        %2111 = vmatpush2.xpose.msra.mxu0 0.0
        %2112 = vmatprep.subr.mxu0 0.0
        %2113 = vmatpush2.xpose.msra.mxu0 0.0
        %2114 = vmatprep.subr.mxu0 0.0
        %2115 = vmatpush2.xpose.msra.mxu0 0.0
        %2116 = vmatprep.subr.mxu0 0.0
        %2117 = vmatpush2.xpose.msra.mxu0 0.0
        %2118 = vmatprep.subr.mxu0 0.0
        %2119 = vmatpush2.xpose.msra.mxu0 0.0
        %2120 = vmatprep.subr.mxu0 0.0
        %2121 = vmatpush2.xpose.msra.mxu0 0.0
        %2122 = vmatprep.subr.mxu0 0.0
        %2123 = vmatpush2.xpose.msra.mxu0 0.0
        %2124 = vmatprep.subr.mxu0 0.0
        %2125 = vmatpush2.xpose.msra.mxu0 0.0
        %2126 = vmatprep.subr.mxu0 0.0
        %2127 = vmatpush2.xpose.msra.mxu0 0.0
        %2128 = vmatprep.mubr.f32.mxu0 0.0
        %2129 = vmatmul.mubr.f32.gmra.mxu0 %v2060
        %v2130 = vpop.f32.mrf.mxu0
        %v2131 = vadd.f32 0.0, %v2130
        %v2132 = vpop.f32.mrf.mxu0
        %2133 = vdwg.mxu0
        %v2134 = vsel %vm440, %v2131, -inf
        %2135 = vmax.xlane.f32.xlu0 %v2134
        %v2136 = vpop.xlane.xlu0 %2135
        %v2137 = vsub.f32 %v2131, %v2136
        %v2138 = vmul.f32 %v2137, 1.442695
        %v2139 = vpow.pop %v2138
        %v2140 = vsel %vm440, %v2139, 0.0
        %2141 = vadd.xlane.f32.xlu0 %v2140
        %v2142 = vpop.xlane.xlu0 %2141
        %v2143 = vrcp.pop %v2142
        %v2144 = vmul.f32 %v2139, %v2143
        %2145 = vrot.lane.b32.xlu0 %v357, 36
        %v2146 = vpop.permute.xlu0 %2145
        %v2149 = vsel %vm440, %v2144, 0
        %2151 = vmatprep.subr.mxu0 0.0
        %2152 = vmatpush1.msra.mxu0 0.0
        %2153 = vmatprep.subr.mxu0 0.0
        %2154 = vmatpush1.msra.mxu0 0.0
        %2155 = vmatprep.subr.mxu0 0.0
        %2156 = vmatpush1.msra.mxu0 0.0
        %2157 = vmatprep.subr.mxu0 0.0
        %2158 = vmatpush1.msra.mxu0 0.0
        %2159 = vmatprep.subr.mxu0 0.0
        %2160 = vmatpush1.msra.mxu0 0.0
        %2161 = vmatprep.subr.mxu0 0.0
        %2162 = vmatpush1.msra.mxu0 0.0
        %2163 = vmatprep.subr.mxu0 0.0
        %2164 = vmatpush1.msra.mxu0 0.0
        %2165 = vmatprep.subr.mxu0 0.0
        %2166 = vmatpush1.msra.mxu0 0.0
        %2167 = vmatprep.subr.mxu0 0.0
        %2168 = vmatpush1.msra.mxu0 0.0
        %2169 = vmatprep.subr.mxu0 0.0
        %2170 = vmatpush1.msra.mxu0 0.0
        %2171 = vmatprep.subr.mxu0 0.0
        %2172 = vmatpush1.msra.mxu0 0.0
        %2173 = vmatprep.subr.mxu0 0.0
        %2174 = vmatpush1.msra.mxu0 0.0
        %2175 = vmatprep.subr.mxu0 0.0
        %2176 = vmatpush1.msra.mxu0 0.0
        %2177 = vmatprep.subr.mxu0 0.0
        %2178 = vmatpush1.msra.mxu0 0.0
        %2179 = vmatprep.subr.mxu0 0.0
        %2180 = vmatpush1.msra.mxu0 0.0
        %2181 = vmatprep.subr.mxu0 0.0
        %2182 = vmatpush1.msra.mxu0 %v2146
        %2183 = vmatprep.subr.mxu0 0.0
        %2184 = vmatpush2.msra.mxu0 0.0
        %2185 = vmatprep.subr.mxu0 0.0
        %2186 = vmatpush2.msra.mxu0 0.0
        %2187 = vmatprep.subr.mxu0 0.0
        %2188 = vmatpush2.msra.mxu0 0.0
        %2189 = vmatprep.subr.mxu0 0.0
        %2190 = vmatpush2.msra.mxu0 0.0
        %2191 = vmatprep.subr.mxu0 0.0
        %2192 = vmatpush2.msra.mxu0 0.0
        %2193 = vmatprep.subr.mxu0 0.0
        %2194 = vmatpush2.msra.mxu0 0.0
        %2195 = vmatprep.subr.mxu0 0.0
        %2196 = vmatpush2.msra.mxu0 0.0
        %2197 = vmatprep.subr.mxu0 0.0
        %2198 = vmatpush2.msra.mxu0 0.0
        %2199 = vmatprep.subr.mxu0 0.0
        %2200 = vmatpush2.msra.mxu0 0.0
        %2201 = vmatprep.subr.mxu0 0.0
        %2202 = vmatpush2.msra.mxu0 0.0
        %2203 = vmatprep.subr.mxu0 0.0
        %2204 = vmatpush2.msra.mxu0 0.0
        %2205 = vmatprep.subr.mxu0 0.0
        %2206 = vmatpush2.msra.mxu0 0.0
        %2207 = vmatprep.subr.mxu0 0.0
        %2208 = vmatpush2.msra.mxu0 0.0
        %2209 = vmatprep.subr.mxu0 0.0
        %2210 = vmatpush2.msra.mxu0 0.0
        %2211 = vmatprep.subr.mxu0 0.0
        %2212 = vmatpush2.msra.mxu0 0.0
        %2213 = vmatprep.subr.mxu0 0.0
        %2214 = vmatpush2.msra.mxu0 0.0
        %2215 = vmatprep.mubr.f32.mxu0 0.0
        %2216 = vmatmul.mubr.f32.gmra.mxu0 %v2149
        %v2217 = vpop.f32.mrf.mxu0
        %v2218 = vadd.f32 0.0, %v2217
        %v2219 = vpop.f32.mrf.mxu0
        %2220 = vdwg.mxu0
        %v2221 = vrot.slane %v278, 4
        %v2223 = vsel %vm364, %v2218, 0
        %v2225 = vsel %vm698, %v2221, 0
        %2227 = vmatprep.subr.mxu0 0.0
        %2228 = vmatpush1.msra.mxu0 0.0
        %2229 = vmatprep.subr.mxu0 0.0
        %2230 = vmatpush1.msra.mxu0 0.0
        %2231 = vmatprep.subr.mxu0 0.0
        %2232 = vmatpush1.msra.mxu0 0.0
        %2233 = vmatprep.subr.mxu0 0.0
        %2234 = vmatpush1.msra.mxu0 0.0
        %2235 = vmatprep.subr.mxu0 0.0
        %2236 = vmatpush1.msra.mxu0 0.0
        %2237 = vmatprep.subr.mxu0 0.0
        %2238 = vmatpush1.msra.mxu0 0.0
        %2239 = vmatprep.subr.mxu0 0.0
        %2240 = vmatpush1.msra.mxu0 0.0
        %2241 = vmatprep.subr.mxu0 0.0
        %2242 = vmatpush1.msra.mxu0 0.0
        %2243 = vmatprep.subr.mxu0 0.0
        %2244 = vmatpush1.msra.mxu0 0.0
        %2245 = vmatprep.subr.mxu0 0.0
        %2246 = vmatpush1.msra.mxu0 0.0
        %2247 = vmatprep.subr.mxu0 0.0
        %2248 = vmatpush1.msra.mxu0 0.0
        %2249 = vmatprep.subr.mxu0 0.0
        %2250 = vmatpush1.msra.mxu0 0.0
        %2251 = vmatprep.subr.mxu0 0.0
        %2252 = vmatpush1.msra.mxu0 0.0
        %2253 = vmatprep.subr.mxu0 0.0
        %2254 = vmatpush1.msra.mxu0 0.0
        %2255 = vmatprep.subr.mxu0 0.0
        %2256 = vmatpush1.msra.mxu0 0.0
        %2257 = vmatprep.subr.mxu0 0.0
        %2258 = vmatpush1.msra.mxu0 %v2225
        %2259 = vmatprep.subr.mxu0 0.0
        %2260 = vmatpush2.msra.mxu0 0.0
        %2261 = vmatprep.subr.mxu0 0.0
        %2262 = vmatpush2.msra.mxu0 0.0
        %2263 = vmatprep.subr.mxu0 0.0
        %2264 = vmatpush2.msra.mxu0 0.0
        %2265 = vmatprep.subr.mxu0 0.0
        %2266 = vmatpush2.msra.mxu0 0.0
        %2267 = vmatprep.subr.mxu0 0.0
        %2268 = vmatpush2.msra.mxu0 0.0
        %2269 = vmatprep.subr.mxu0 0.0
        %2270 = vmatpush2.msra.mxu0 0.0
        %2271 = vmatprep.subr.mxu0 0.0
        %2272 = vmatpush2.msra.mxu0 0.0
        %2273 = vmatprep.subr.mxu0 0.0
        %2274 = vmatpush2.msra.mxu0 0.0
        %2275 = vmatprep.subr.mxu0 0.0
        %2276 = vmatpush2.msra.mxu0 0.0
        %2277 = vmatprep.subr.mxu0 0.0
        %2278 = vmatpush2.msra.mxu0 0.0
        %2279 = vmatprep.subr.mxu0 0.0
        %2280 = vmatpush2.msra.mxu0 0.0
        %2281 = vmatprep.subr.mxu0 0.0
        %2282 = vmatpush2.msra.mxu0 0.0
        %2283 = vmatprep.subr.mxu0 0.0
        %2284 = vmatpush2.msra.mxu0 0.0
        %2285 = vmatprep.subr.mxu0 0.0
        %2286 = vmatpush2.msra.mxu0 0.0
        %2287 = vmatprep.subr.mxu0 0.0
        %2288 = vmatpush2.msra.mxu0 0.0
        %2289 = vmatprep.subr.mxu0 0.0
        %2290 = vmatpush2.msra.mxu0 0.0
        %2291 = vmatprep.mubr.f32.mxu0 0.0
        %2292 = vmatmul.mubr.f32.gmra.mxu0 %v2223
        %v2293 = vpop.f32.mrf.mxu0
        %v2294 = vadd.f32 0.0, %v2293
        %v2295 = vpop.f32.mrf.mxu0
        %2296 = vdwg.mxu0
        %v2297 = vadd.f32 %v2055, %v2294
        %v2299 = vlaneseq
        %v2300 = vshrl.u32 %v2299, 7
        %v2301 = vsub.s32 0, %v2300
        %v2302 = vrot.slane %v279, %v2301
        %v2304 = vadd.f32 %v2297, %v2302
        %2305 = vst.msk [vmem:[%s268] sm:$0xff] %vm286, %v2304
        %s2306 = sand.u32 %s141, 1
        %s2307 = scalar_lea.sflag [#allocation4], %s2306
        %s2308 = sand.u32 %s141, 1
        %s2309 = smul.addr %s2308, 8
        %s2310 = scalar_lea.vmem [#allocation8], %s2309
        // Predicated region
        $region53: #{tpu_custom_call.1} parent=39 // pred_check
          %p2311 = pneg %p151
        $region54: #{tpu_custom_call.1} parent=39 // pred_check_branch
          %2313 = sbr.rel (%p2311) target = $region56
        $region55: #{tpu_custom_call.1} parent=39 // pred_region
          %s2315 = ssub.s32 128, 128
          %2316 = vsyncadd %s2307, %s2315
          %s2317 = smul.addr %s23, 128
          %s2318 = scalar_lea.hbm %s5, %s2317
          %s2320 = sshll.u32 %s2310, 4
          %s2321 = int_to_ptr.vmem [resolvable:$true] %s2320
          %2323 = dma.vmem_to_hbm [thread:$0]  %s2321, 128, %s2318, %s2307
        $region56: #{tpu_custom_call.1} parent=39 // pred_fallthru
          _
      $region40: #{tpu_custom_call.1} parent=5 // pred_fallthru
        _
      %p2324 = scmp.le.s32.totalorder 2, %s18
      // Predicated region
      $region57: #{tpu_custom_call.1} parent=5 // pred_check
        %p2325 = pneg %p2324
      $region58: #{tpu_custom_call.1} parent=5 // pred_check_branch
        %2327 = sbr.rel (%p2325) target = $region60
      $region59: #{tpu_custom_call.1} parent=5 // pred_region
        %s2328 = ssub.s32 %s18, 2
        // Predicated region
        $region61: #{tpu_custom_call.1} parent=59 // pred_check
          %p2329 = pneg %p157
        $region62: #{tpu_custom_call.1} parent=59 // pred_check_branch
          %2331 = sbr.rel (%p2329) target = $region64
        $region63: #{tpu_custom_call.1} parent=59 // pred_region
          %s2332 = sand.u32 %s142, 1
          %s2333 = scalar_lea.sflag [#allocation4], %s2332
          %s2334 = sand.u32 %s142, 1
          %s2335 = smul.addr %s2334, 8
          %s2336 = scalar_lea.vmem [#allocation8], %s2335
          %2337 = dma.done %s2333, 128
        $region64: #{tpu_custom_call.1} parent=59 // pred_fallthru
          _
      $region60: #{tpu_custom_call.1} parent=5 // pred_fallthru
        _
    $region6: #{tpu_custom_call.1} parent=1 // loop_footer
      %s22 = sadd.s32 1, %s18
    $region7: #{tpu_custom_call.1} parent=1 // loop_footer_branch
      %17 = sbr.rel target = $region3
    $region8: #{tpu_custom_call.1} parent=1 // loop_exit
      _
    %2338 = vsyncpa [#allocation3], 1
    %s2339 = scalar_lea.sflag [#allocation3], 1
    %2340 = vsyncpa %s2339, 1
    %2341 = vsyncpa [#allocation6], 1
    %2342 = vsyncpa [#allocation4], 1
    %s2343 = scalar_lea.sflag [#allocation4], 1
    %2344 = vsyncpa %s2343, 1

</llo_original>
